<compile_context>
chip_gen: v7x
topology: tpu7x:2x2x1
jax: 0.10.0
libtpu: 0.0.40
codegen_flags: <defaults>
</compile_context>

<pallas_src>
import functools
import math

import jax
import jax.numpy as jnp
from jax.experimental import pallas as pl
from jax.experimental.pallas import tpu as pltpu


# ---------------------------------------------------------------------------
# Kernel: one transformer block for one batch element, tokens resident in VMEM
# ---------------------------------------------------------------------------
def _block_kernel(
    x_ref,
    ln1w_ref, ln1b_ref, qkvw_ref, projw_ref, projb_ref,
    ln2w_ref, ln2b_ref, fc1w_ref, fc1b_ref, fc2w_ref, fc2b_ref,
    out_ref,
    *, num_heads, valid_tokens, eps,
):
    f32 = jnp.float32
    bf16 = jnp.bfloat16

    x = x_ref[...].astype(f32)                 # (Np, D) fp32 residual stream
    Np, D = x.shape
    hd = D // num_heads
    scale = float(hd) ** -0.5

    def layernorm(t, w_ref, b_ref):            # stats in fp32; w/b are (1, D)
        mu = jnp.mean(t, axis=-1, keepdims=True)
        c = t - mu
        var = jnp.mean(c * c, axis=-1, keepdims=True)
        return c * jax.lax.rsqrt(var + eps) * w_ref[...] + b_ref[...]

    # ---------------- attention ----------------
    h = layernorm(x, ln1w_ref, ln1b_ref).astype(bf16)
    qkv = jnp.dot(h, qkvw_ref[...], preferred_element_type=f32)       # (Np, 3D) f32

    # scale folded into q (O(N*D) instead of O(N*N)); cast to bf16 BEFORE any
    # head-split relayout so the XLU/vreg traffic is on 16-bit data.
    q = (qkv[:, 0:D] * scale).astype(bf16).reshape(Np, num_heads, hd)   # (Np, H, hd)
    k = qkv[:, D:2 * D].astype(bf16).reshape(Np, num_heads, hd)
    v = qkv[:, 2 * D:3 * D].astype(bf16).reshape(Np, num_heads, hd)

    # scores directly over the natural (Np, H, hd) layout; h is the batch dim.
    att = jnp.einsum("qhd,khd->hqk", q, k,
                     preferred_element_type=f32)                      # (H, Np, Np) f32

    if valid_tokens < Np:   # static: only emitted when the wrapper padded the tokens
        kid = jax.lax.broadcasted_iota(jnp.int32, (1, Np), 1)
        att = att + jnp.where(kid < valid_tokens,
                              jnp.float32(0.0), jnp.float32(-1e30))

    # online-style softmax with deferred normalization: unnormalized exp feeds the
    # MXU, the 1/rowsum (EUP reciprocal) is applied to the small (H, Np, hd) result.
    att = att - jnp.max(att, axis=-1, keepdims=True)
    p = jnp.exp(att)                                                  # (H, Np, Np) f32
    denom = jnp.sum(p, axis=-1, keepdims=True)                        # (H, Np, 1)  f32

    yh = jnp.einsum("hqk,khd->hqd", p.astype(bf16), v,
                    preferred_element_type=f32)                       # (H, Np, hd) f32
    yh = yh * pl.reciprocal(denom, approx=True)

    # merge heads (bf16 relayout) and project
    y = jnp.transpose(yh.astype(bf16), (1, 0, 2)).reshape(Np, D)      # (Np, D) bf16
    y = jnp.dot(y, projw_ref[...],
                preferred_element_type=f32) + projb_ref[...]
    x = x + y                                                         # residual (fp32)

    # ---------------- MLP ----------------
    h = layernorm(x, ln2w_ref, ln2b_ref).astype(bf16)
    h = jnp.dot(h, fc1w_ref[...], preferred_element_type=f32) + fc1b_ref[...]
    h = 0.5 * h * (1.0 + jax.lax.erf(h * 0.7071067811865476))         # exact GELU (fp32)
    h = jnp.dot(h.astype(bf16), fc2w_ref[...],
                preferred_element_type=f32) + fc2b_ref[...]

    out_ref[...] = (x + h).astype(out_ref.dtype)


# ---------------------------------------------------------------------------
# Wrapper: pad tokens to a 16-row multiple, grid over batch (parallel)
# ---------------------------------------------------------------------------
def _default_vmem_limit_bytes():
    """~56 MiB on v7x (64 MiB VMEM), ~100 MiB on v5e/v6e (128 MiB), 48 MiB fallback."""
    try:
        cap = int(pltpu.get_tpu_info().vmem_capacity_bytes)
    except Exception:
        return 48 * 1024 * 1024
    return max(32 * 1024 * 1024, min(cap - 8 * 1024 * 1024, 100 * 1024 * 1024))


def block_forward(x, params, *, num_heads, eps=1e-6, vmem_limit_bytes=None):
    """x: (B, N, D) fp32 tokens. Returns (B, N, D) fp32."""
    B, N, D = x.shape
    assert D % num_heads == 0
    Hm = params["fc1_w"].shape[-1]

    if vmem_limit_bytes is None:
        vmem_limit_bytes = _default_vmem_limit_bytes()

    # Pad token dim to a multiple of 16 (bf16 packs 16 rows per sublane group).
    # TODO(synk): in a multi-layer stack, pad once in the data pipeline instead of
    #             per-block pad + slice (each is a full HBM copy of the activations).
    Np = ((N + 15) // 16) * 16
    if Np != N:
        x = jnp.pad(x, ((0, 0), (0, Np - N), (0, 0)))

    kernel = functools.partial(
        _block_kernel, num_heads=num_heads, valid_tokens=N, eps=eps)

    def rep(r, c):
        # Replicated (grid-invariant) operand: block index is always (0, 0), so a
        # second pipeline buffer is pure VMEM waste -> single-buffer it.
        return pl.BlockSpec((r, c), lambda b: (0, 0),
                            pipeline_mode=pl.Buffered(buffer_count=1))

    tok_in = pl.BlockSpec((None, Np, D), lambda b: (b, 0, 0))   # squeezed batch dim
    tok_out = pl.BlockSpec((None, Np, D), lambda b: (b, 0, 0))

    # Advisory cost estimate so XLA can overlap neighboring HBM work with this call.
    weight_bytes = sum(int(v.size) * v.dtype.itemsize for v in params.values())
    flops = 2 * B * Np * (4 * D * D + 2 * Np * D + 2 * D * Hm)
    transcendentals = B * (num_heads * Np * Np + Np * Hm)
    bytes_accessed = weight_bytes + 2 * B * Np * D * 4
    cost = pl.CostEstimate(flops=flops, transcendentals=transcendentals,
                           bytes_accessed=bytes_accessed)

    out = pl.pallas_call(
        kernel,
        out_shape=jax.ShapeDtypeStruct((B, Np, D), jnp.float32),
        grid_spec=pltpu.PrefetchScalarGridSpec(
            num_scalar_prefetch=0,
            grid=(B,),
            in_specs=[
                tok_in,                         # x tokens (one batch per grid step)
                rep(1, D), rep(1, D),           # ln1 w / b           (fp32)
                rep(D, 3 * D),                  # qkv_w               (bf16)
                rep(D, D), rep(1, D),           # proj w / b          (bf16 / fp32)
                rep(1, D), rep(1, D),           # ln2 w / b           (fp32)
                rep(D, Hm), rep(1, Hm),         # fc1 w / b           (bf16 / fp32)
                rep(Hm, D), rep(1, D),          # fc2 w / b           (bf16 / fp32)
            ],
            out_specs=tok_out,
        ),
        compiler_params=pltpu.CompilerParams(
            dimension_semantics=("parallel",),   # megacore: batch split across TCs
            vmem_limit_bytes=vmem_limit_bytes,
        ),
        cost_estimate=cost,
    )(
        x,
        params["ln1_w"], params["ln1_b"], params["qkv_w"],
        params["proj_w"], params["proj_b"],
        params["ln2_w"], params["ln2_b"],
        params["fc1_w"], params["fc1_b"], params["fc2_w"], params["fc2_b"],
    )
    return out[:, :N, :] if Np != N else out


# ---------------------------------------------------------------------------
# Pure-JAX fp32 reference (matches the PyTorch Block forward)
# ---------------------------------------------------------------------------
def block_reference(x, params, *, num_heads, eps=1e-6):
    B, N, D = x.shape
    hd = D // num_heads
    scale = hd ** -0.5
    f32 = jnp.float32

    def ln(t, w, b):
        mu = t.mean(-1, keepdims=True)
        var = ((t - mu) ** 2).mean(-1, keepdims=True)
        return (t - mu) / jnp.sqrt(var + eps) * w.reshape(-1) + b.reshape(-1)

    h = ln(x, params["ln1_w"], params["ln1_b"])
    qkv = h @ params["qkv_w"].astype(f32)                       # (B, N, 3D)
    qkv = qkv.reshape(B, N, 3, num_heads, hd).transpose(2, 0, 3, 1, 4)
    q, k, v = qkv[0], qkv[1], qkv[2]                            # (B, H, N, hd)
    att = jnp.einsum("bhqd,bhkd->bhqk", q, k) * scale
    att = jax.nn.softmax(att, axis=-1)
    y = jnp.einsum("bhqk,bhkd->bhqd", att, v).transpose(0, 2, 1, 3).reshape(B, N, D)
    y = y @ params["proj_w"].astype(f32) + params["proj_b"].reshape(-1)
    x = x + y
    h = ln(x, params["ln2_w"], params["ln2_b"])
    h = h @ params["fc1_w"].astype(f32) + params["fc1_b"].reshape(-1)
    h = 0.5 * h * (1.0 + jax.lax.erf(h / math.sqrt(2.0)))
    h = h @ params["fc2_w"].astype(f32) + params["fc2_b"].reshape(-1)
    return x + h


# ---------------------------------------------------------------------------
# Deterministic parameters (weights stored (in, out) = torch W.T; big mats in bf16)
# ---------------------------------------------------------------------------
def make_params(key, *, dim, mlp_ratio=4.0):
    D = dim
    Hm = int(D * mlp_ratio)
    ks = jax.random.split(key, 10)
    std = 0.02
    bf16 = jnp.bfloat16
    f32 = jnp.float32
    return {
        "ln1_w": 1.0 + 0.02 * jax.random.normal(ks[0], (1, D), f32),
        "ln1_b": 0.02 * jax.random.normal(ks[1], (1, D), f32),
        "qkv_w": (std * jax.random.normal(ks[2], (D, 3 * D), f32)).astype(bf16),  # qkv_bias=False
        "proj_w": (std * jax.random.normal(ks[3], (D, D), f32)).astype(bf16),
        "proj_b": 0.02 * jax.random.normal(ks[4], (1, D), f32),
        "ln2_w": 1.0 + 0.02 * jax.random.normal(ks[5], (1, D), f32),
        "ln2_b": 0.02 * jax.random.normal(ks[6], (1, D), f32),
        "fc1_w": (std * jax.random.normal(ks[7], (D, Hm), f32)).astype(bf16),
        "fc1_b": 0.02 * jax.random.normal(ks[8], (1, Hm), f32),
        "fc2_w": (std * jax.random.normal(ks[9], (Hm, D), f32)).astype(bf16),
        "fc2_b": jnp.zeros((1, D), f32),
    }


if __name__ == "__main__":
    B, D, num_heads, mlp_ratio = 2, 64, 4, 4.0

    key = jax.random.PRNGKey(0)
    kp, kx1, kx2 = jax.random.split(key, 3)
    params = make_params(kp, dim=D, mlp_ratio=mlp_ratio)

    fwd = jax.jit(functools.partial(block_forward, num_heads=num_heads))

    # N=16: 16-row-aligned fast path; N=13: exercises padding + key mask path.
    for N, kx in ((16, kx1), (13, kx2)):
        x = jax.random.normal(kx, (B, N, D), jnp.float32)
        out = fwd(x, params)
        jax.block_until_ready(out)
        assert out.shape == (B, N, D), out.shape
        assert bool(jnp.all(jnp.isfinite(out)))
        ref = block_reference(x, params, num_heads=num_heads)
        err = float(jnp.max(jnp.abs(out - ref)))
        assert err < 2e-2, f"max abs error {err} (N={N})"

    print("KERNEL_OK")
</pallas_src>

<mosaic_0001>
module attributes {stable_mosaic.version = 11 : i64} {
  func.func @_block_kernel(%arg0: i32, %arg1: memref<1x16x64xf32, #tpu.memory_space<vmem>>, %arg2: memref<1x64xf32, #tpu.memory_space<vmem>>, %arg3: memref<1x64xf32, #tpu.memory_space<vmem>>, %arg4: memref<64x192xbf16, #tpu.memory_space<vmem>>, %arg5: memref<64x64xbf16, #tpu.memory_space<vmem>>, %arg6: memref<1x64xf32, #tpu.memory_space<vmem>>, %arg7: memref<1x64xf32, #tpu.memory_space<vmem>>, %arg8: memref<1x64xf32, #tpu.memory_space<vmem>>, %arg9: memref<64x256xbf16, #tpu.memory_space<vmem>>, %arg10: memref<1x256xf32, #tpu.memory_space<vmem>>, %arg11: memref<256x64xbf16, #tpu.memory_space<vmem>>, %arg12: memref<1x64xf32, #tpu.memory_space<vmem>>, %arg13: memref<1x16x64xf32, #tpu.memory_space<vmem>>) attributes {dimension_semantics = [#tpu.dimension_semantics<parallel>], iteration_bounds = array<i64: 2>, scalar_prefetch = 0 : i64, scratch_operands = 0 : i64, tpu.core_type = #tpu.core_type<tc>, window_params = [{transform_indices = @transform_0, window_bounds = array<i64: 1, 16, 64>}, {pipeline_mode = #tpu.pipeline_mode<synchronous>, transform_indices = @transform_1, window_bounds = array<i64: 1, 64>}, {pipeline_mode = #tpu.pipeline_mode<synchronous>, transform_indices = @transform_2, window_bounds = array<i64: 1, 64>}, {pipeline_mode = #tpu.pipeline_mode<synchronous>, transform_indices = @transform_3, window_bounds = array<i64: 64, 192>}, {pipeline_mode = #tpu.pipeline_mode<synchronous>, transform_indices = @transform_4, window_bounds = array<i64: 64, 64>}, {pipeline_mode = #tpu.pipeline_mode<synchronous>, transform_indices = @transform_5, window_bounds = array<i64: 1, 64>}, {pipeline_mode = #tpu.pipeline_mode<synchronous>, transform_indices = @transform_6, window_bounds = array<i64: 1, 64>}, {pipeline_mode = #tpu.pipeline_mode<synchronous>, transform_indices = @transform_7, window_bounds = array<i64: 1, 64>}, {pipeline_mode = #tpu.pipeline_mode<synchronous>, transform_indices = @transform_8, window_bounds = array<i64: 64, 256>}, {pipeline_mode = #tpu.pipeline_mode<synchronous>, transform_indices = @transform_9, window_bounds = array<i64: 1, 256>}, {pipeline_mode = #tpu.pipeline_mode<synchronous>, transform_indices = @transform_10, window_bounds = array<i64: 256, 64>}, {pipeline_mode = #tpu.pipeline_mode<synchronous>, transform_indices = @transform_11, window_bounds = array<i64: 1, 64>}, {transform_indices = @transform_12, window_bounds = array<i64: 1, 16, 64>}]} {
    %c0 = arith.constant 0 : index
    %c0_0 = arith.constant 0 : index
    %c0_1 = arith.constant 0 : index
    %0 = vector.load %arg1[%c0, %c0_0, %c0_1] : memref<1x16x64xf32, #tpu.memory_space<vmem>>, vector<1x16x64xf32>
    %1 = vector.shape_cast %0 : vector<1x16x64xf32> to vector<16x64xf32>
    %cst = arith.constant dense<0.000000e+00> : vector<16xf32>
    %2 = vector.multi_reduction <add>, %1, %cst [1] : vector<16x64xf32> to vector<16xf32>
    %3 = vector.shape_cast %2 : vector<16xf32> to vector<16x1xf32>
    %cst_2 = arith.constant 6.400000e+01 : f32
    %4 = vector.broadcast %cst_2 : f32 to vector<16x1xf32>
    %5 = arith.divf %3, %4 : vector<16x1xf32>
    %6 = vector.broadcast %5 : vector<16x1xf32> to vector<16x64xf32>
    %7 = arith.subf %1, %6 : vector<16x64xf32>
    %8 = arith.mulf %7, %7 : vector<16x64xf32>
    %cst_3 = arith.constant dense<0.000000e+00> : vector<16xf32>
    %9 = vector.multi_reduction <add>, %8, %cst_3 [1] : vector<16x64xf32> to vector<16xf32>
    %10 = vector.shape_cast %9 : vector<16xf32> to vector<16x1xf32>
    %cst_4 = arith.constant 6.400000e+01 : f32
    %11 = vector.broadcast %cst_4 : f32 to vector<16x1xf32>
    %12 = arith.divf %10, %11 : vector<16x1xf32>
    %cst_5 = arith.constant 9.99999997E-7 : f32
    %13 = vector.broadcast %cst_5 : f32 to vector<16x1xf32>
    %14 = arith.addf %12, %13 : vector<16x1xf32>
    %15 = math.rsqrt %14 : vector<16x1xf32>
    %16 = vector.broadcast %15 : vector<16x1xf32> to vector<16x64xf32>
    %17 = arith.mulf %7, %16 : vector<16x64xf32>
    %c0_6 = arith.constant 0 : index
    %c0_7 = arith.constant 0 : index
    %18 = vector.load %arg2[%c0_6, %c0_7] : memref<1x64xf32, #tpu.memory_space<vmem>>, vector<1x64xf32>
    %19 = vector.broadcast %18 : vector<1x64xf32> to vector<16x64xf32>
    %20 = arith.mulf %17, %19 : vector<16x64xf32>
    %c0_8 = arith.constant 0 : index
    %c0_9 = arith.constant 0 : index
    %21 = vector.load %arg3[%c0_8, %c0_9] : memref<1x64xf32, #tpu.memory_space<vmem>>, vector<1x64xf32>
    %22 = vector.broadcast %21 : vector<1x64xf32> to vector<16x64xf32>
    %23 = arith.addf %20, %22 : vector<16x64xf32>
    %24 = arith.truncf %23 : vector<16x64xf32> to vector<16x64xbf16>
    %c0_10 = arith.constant 0 : index
    %c0_11 = arith.constant 0 : index
    %25 = vector.load %arg4[%c0_10, %c0_11] : memref<64x192xbf16, #tpu.memory_space<vmem>>, vector<64x192xbf16>
    %cst_12 = arith.constant dense<0.000000e+00> : vector<16x192xf32>
    %26 = tpu.matmul %24, %25, %cst_12 {dimension_numbers = #tpu.dot_dimension_numbers<[1], [0], [0], [1], [0, 0, 1, 1], [], []>} : vector<16x64xbf16>, vector<64x192xbf16>, vector<16x192xf32> -> vector<16x192xf32>
    %27 = vector.extract_strided_slice %26 {offsets = [0, 0], sizes = [16, 64], strides = [1, 1]} : vector<16x192xf32> to vector<16x64xf32>
    %cst_13 = arith.constant 2.500000e-01 : f32
    %28 = vector.broadcast %cst_13 : f32 to vector<16x64xf32>
    %29 = arith.mulf %27, %28 : vector<16x64xf32>
    %30 = arith.truncf %29 : vector<16x64xf32> to vector<16x64xbf16>
    %31 = vector.shape_cast %30 : vector<16x64xbf16> to vector<16x4x16xbf16>
    %32 = vector.extract_strided_slice %26 {offsets = [0, 64], sizes = [16, 64], strides = [1, 1]} : vector<16x192xf32> to vector<16x64xf32>
    %33 = arith.truncf %32 : vector<16x64xf32> to vector<16x64xbf16>
    %34 = vector.shape_cast %33 : vector<16x64xbf16> to vector<16x4x16xbf16>
    %35 = vector.extract_strided_slice %26 {offsets = [0, 128], sizes = [16, 64], strides = [1, 1]} : vector<16x192xf32> to vector<16x64xf32>
    %36 = arith.truncf %35 : vector<16x64xf32> to vector<16x64xbf16>
    %37 = vector.shape_cast %36 : vector<16x64xbf16> to vector<16x4x16xbf16>
    "tpu.trace_start"() <{level = 10 : i32, message = "qhd,khd->hqk"}> : () -> ()
    %cst_14 = arith.constant dense<0.000000e+00> : vector<4x16x16xf32>
    %38 = tpu.matmul %31, %34, %cst_14 {dimension_numbers = #tpu.dot_dimension_numbers<[2], [2], [0], [0], [0, 1, 0, 0, 1, 0], [1], [1]>} : vector<16x4x16xbf16>, vector<16x4x16xbf16>, vector<4x16x16xf32> -> vector<4x16x16xf32>
    "tpu.trace_stop"() : () -> ()
    %cst_15 = arith.constant dense<0xFF800000> : vector<4x16xf32>
    %39 = vector.multi_reduction <maximumf>, %38, %cst_15 [2] : vector<4x16x16xf32> to vector<4x16xf32>
    %40 = vector.shape_cast %39 : vector<4x16xf32> to vector<4x16x1xf32>
    %41 = vector.broadcast %40 : vector<4x16x1xf32> to vector<4x16x16xf32>
    %42 = arith.subf %38, %41 : vector<4x16x16xf32>
    %43 = math.exp %42 : vector<4x16x16xf32>
    %cst_16 = arith.constant dense<0.000000e+00> : vector<4x16xf32>
    %44 = vector.multi_reduction <add>, %43, %cst_16 [2] : vector<4x16x16xf32> to vector<4x16xf32>
    %45 = vector.shape_cast %44 : vector<4x16xf32> to vector<4x16x1xf32>
    %46 = arith.truncf %43 : vector<4x16x16xf32> to vector<4x16x16xbf16>
    "tpu.trace_start"() <{level = 10 : i32, message = "hqk,khd->hqd"}> : () -> ()
    %cst_17 = arith.constant dense<0.000000e+00> : vector<4x16x16xf32>
    %47 = tpu.matmul %46, %37, %cst_17 {dimension_numbers = #tpu.dot_dimension_numbers<[2], [0], [1], [2], [0, 0, 0, 1, 1, 2], [0], [1]>} : vector<4x16x16xbf16>, vector<16x4x16xbf16>, vector<4x16x16xf32> -> vector<4x16x16xf32>
    "tpu.trace_stop"() : () -> ()
    %48 = tpu.reciprocal %45 {approx = true} : vector<4x16x1xf32> -> vector<4x16x1xf32>
    %49 = vector.broadcast %48 : vector<4x16x1xf32> to vector<4x16x16xf32>
    %50 = arith.mulf %47, %49 : vector<4x16x16xf32>
    %51 = arith.truncf %50 : vector<4x16x16xf32> to vector<4x16x16xbf16>
    %52 = tpu.transpose %51, [1, 0, 2] : vector<4x16x16xbf16> -> vector<16x4x16xbf16>
    %53 = vector.shape_cast %52 : vector<16x4x16xbf16> to vector<16x64xbf16>
    %c0_18 = arith.constant 0 : index
    %c0_19 = arith.constant 0 : index
    %54 = vector.load %arg5[%c0_18, %c0_19] : memref<64x64xbf16, #tpu.memory_space<vmem>>, vector<64x64xbf16>
    %cst_20 = arith.constant dense<0.000000e+00> : vector<16x64xf32>
    %55 = tpu.matmul %53, %54, %cst_20 {dimension_numbers = #tpu.dot_dimension_numbers<[1], [0], [0], [1], [0, 0, 1, 1], [], []>} : vector<16x64xbf16>, vector<64x64xbf16>, vector<16x64xf32> -> vector<16x64xf32>
    %c0_21 = arith.constant 0 : index
    %c0_22 = arith.constant 0 : index
    %56 = vector.load %arg6[%c0_21, %c0_22] : memref<1x64xf32, #tpu.memory_space<vmem>>, vector<1x64xf32>
    %57 = vector.broadcast %56 : vector<1x64xf32> to vector<16x64xf32>
    %58 = arith.addf %55, %57 : vector<16x64xf32>
    %59 = arith.addf %1, %58 : vector<16x64xf32>
    %cst_23 = arith.constant dense<0.000000e+00> : vector<16xf32>
    %60 = vector.multi_reduction <add>, %59, %cst_23 [1] : vector<16x64xf32> to vector<16xf32>
    %61 = vector.shape_cast %60 : vector<16xf32> to vector<16x1xf32>
    %cst_24 = arith.constant 6.400000e+01 : f32
    %62 = vector.broadcast %cst_24 : f32 to vector<16x1xf32>
    %63 = arith.divf %61, %62 : vector<16x1xf32>
    %64 = vector.broadcast %63 : vector<16x1xf32> to vector<16x64xf32>
    %65 = arith.subf %59, %64 : vector<16x64xf32>
    %66 = arith.mulf %65, %65 : vector<16x64xf32>
    %cst_25 = arith.constant dense<0.000000e+00> : vector<16xf32>
    %67 = vector.multi_reduction <add>, %66, %cst_25 [1] : vector<16x64xf32> to vector<16xf32>
    %68 = vector.shape_cast %67 : vector<16xf32> to vector<16x1xf32>
    %cst_26 = arith.constant 6.400000e+01 : f32
    %69 = vector.broadcast %cst_26 : f32 to vector<16x1xf32>
    %70 = arith.divf %68, %69 : vector<16x1xf32>
    %cst_27 = arith.constant 9.99999997E-7 : f32
    %71 = vector.broadcast %cst_27 : f32 to vector<16x1xf32>
    %72 = arith.addf %70, %71 : vector<16x1xf32>
    %73 = math.rsqrt %72 : vector<16x1xf32>
    %74 = vector.broadcast %73 : vector<16x1xf32> to vector<16x64xf32>
    %75 = arith.mulf %65, %74 : vector<16x64xf32>
    %c0_28 = arith.constant 0 : index
    %c0_29 = arith.constant 0 : index
    %76 = vector.load %arg7[%c0_28, %c0_29] : memref<1x64xf32, #tpu.memory_space<vmem>>, vector<1x64xf32>
    %77 = vector.broadcast %76 : vector<1x64xf32> to vector<16x64xf32>
    %78 = arith.mulf %75, %77 : vector<16x64xf32>
    %c0_30 = arith.constant 0 : index
    %c0_31 = arith.constant 0 : index
    %79 = vector.load %arg8[%c0_30, %c0_31] : memref<1x64xf32, #tpu.memory_space<vmem>>, vector<1x64xf32>
    %80 = vector.broadcast %79 : vector<1x64xf32> to vector<16x64xf32>
    %81 = arith.addf %78, %80 : vector<16x64xf32>
    %82 = arith.truncf %81 : vector<16x64xf32> to vector<16x64xbf16>
    %c0_32 = arith.constant 0 : index
    %c0_33 = arith.constant 0 : index
    %83 = vector.load %arg9[%c0_32, %c0_33] : memref<64x256xbf16, #tpu.memory_space<vmem>>, vector<64x256xbf16>
    %cst_34 = arith.constant dense<0.000000e+00> : vector<16x256xf32>
    %84 = tpu.matmul %82, %83, %cst_34 {dimension_numbers = #tpu.dot_dimension_numbers<[1], [0], [0], [1], [0, 0, 1, 1], [], []>} : vector<16x64xbf16>, vector<64x256xbf16>, vector<16x256xf32> -> vector<16x256xf32>
    %c0_35 = arith.constant 0 : index
    %c0_36 = arith.constant 0 : index
    %85 = vector.load %arg10[%c0_35, %c0_36] : memref<1x256xf32, #tpu.memory_space<vmem>>, vector<1x256xf32>
    %86 = vector.broadcast %85 : vector<1x256xf32> to vector<16x256xf32>
    %87 = arith.addf %84, %86 : vector<16x256xf32>
    %cst_37 = arith.constant 5.000000e-01 : f32
    %88 = vector.broadcast %cst_37 : f32 to vector<16x256xf32>
    %89 = arith.mulf %88, %87 : vector<16x256xf32>
    %cst_38 = arith.constant 0.707106769 : f32
    %90 = vector.broadcast %cst_38 : f32 to vector<16x256xf32>
    %91 = arith.mulf %87, %90 : vector<16x256xf32>
    %92 = math.erf %91 : vector<16x256xf32>
    %cst_39 = arith.constant 1.000000e+00 : f32
    %93 = vector.broadcast %cst_39 : f32 to vector<16x256xf32>
    %94 = arith.addf %93, %92 : vector<16x256xf32>
    %95 = arith.mulf %89, %94 : vector<16x256xf32>
    %96 = arith.truncf %95 : vector<16x256xf32> to vector<16x256xbf16>
    %c0_40 = arith.constant 0 : index
    %c0_41 = arith.constant 0 : index
    %97 = vector.load %arg11[%c0_40, %c0_41] : memref<256x64xbf16, #tpu.memory_space<vmem>>, vector<256x64xbf16>
    %cst_42 = arith.constant dense<0.000000e+00> : vector<16x64xf32>
    %98 = tpu.matmul %96, %97, %cst_42 {dimension_numbers = #tpu.dot_dimension_numbers<[1], [0], [0], [1], [0, 0, 1, 1], [], []>} : vector<16x256xbf16>, vector<256x64xbf16>, vector<16x64xf32> -> vector<16x64xf32>
    %c0_43 = arith.constant 0 : index
    %c0_44 = arith.constant 0 : index
    %99 = vector.load %arg12[%c0_43, %c0_44] : memref<1x64xf32, #tpu.memory_space<vmem>>, vector<1x64xf32>
    %100 = vector.broadcast %99 : vector<1x64xf32> to vector<16x64xf32>
    %101 = arith.addf %98, %100 : vector<16x64xf32>
    %102 = arith.addf %59, %101 : vector<16x64xf32>
    %c0_45 = arith.constant 0 : index
    %c0_46 = arith.constant 0 : index
    %c0_47 = arith.constant 0 : index
    %103 = vector.load %arg13[%c0_45, %c0_46, %c0_47] : memref<1x16x64xf32, #tpu.memory_space<vmem>>, vector<1x16x64xf32>
    %104 = vector.shape_cast %103 : vector<1x16x64xf32> to vector<16x64xf32>
    %105 = vector.shape_cast %102 : vector<16x64xf32> to vector<1x16x64xf32>
    tpu.vector_store %arg13[%c0_45, %c0_46, %c0_47], %105 {strides = array<i32>} : memref<1x16x64xf32, #tpu.memory_space<vmem>>, vector<1x16x64xf32>,
    return
  }
  func.func @transform_0(%arg0: i32) -> (i32, i32, i32) {
    %c0_i32 = arith.constant 0 : i32
    %c0_i32_0 = arith.constant 0 : i32
    %c0_i32_1 = arith.constant 0 : i32
    return %arg0, %c0_i32, %c0_i32_0 : i32, i32, i32
  }
  func.func @transform_1(%arg0: i32) -> (i32, i32) {
    %c0_i32 = arith.constant 0 : i32
    %c0_i32_0 = arith.constant 0 : i32
    %c0_i32_1 = arith.constant 0 : i32
    return %c0_i32, %c0_i32_0 : i32, i32
  }
  func.func @transform_2(%arg0: i32) -> (i32, i32) {
    %c0_i32 = arith.constant 0 : i32
    %c0_i32_0 = arith.constant 0 : i32
    %c0_i32_1 = arith.constant 0 : i32
    return %c0_i32, %c0_i32_0 : i32, i32
  }
  func.func @transform_3(%arg0: i32) -> (i32, i32) {
    %c0_i32 = arith.constant 0 : i32
    %c0_i32_0 = arith.constant 0 : i32
    %c0_i32_1 = arith.constant 0 : i32
    return %c0_i32, %c0_i32_0 : i32, i32
  }
  func.func @transform_4(%arg0: i32) -> (i32, i32) {
    %c0_i32 = arith.constant 0 : i32
    %c0_i32_0 = arith.constant 0 : i32
    %c0_i32_1 = arith.constant 0 : i32
    return %c0_i32, %c0_i32_0 : i32, i32
  }
  func.func @transform_5(%arg0: i32) -> (i32, i32) {
    %c0_i32 = arith.constant 0 : i32
    %c0_i32_0 = arith.constant 0 : i32
    %c0_i32_1 = arith.constant 0 : i32
    return %c0_i32, %c0_i32_0 : i32, i32
  }
  func.func @transform_6(%arg0: i32) -> (i32, i32) {
    %c0_i32 = arith.constant 0 : i32
    %c0_i32_0 = arith.constant 0 : i32
    %c0_i32_1 = arith.constant 0 : i32
    return %c0_i32, %c0_i32_0 : i32, i32
  }
  func.func @transform_7(%arg0: i32) -> (i32, i32) {
    %c0_i32 = arith.constant 0 : i32
    %c0_i32_0 = arith.constant 0 : i32
    %c0_i32_1 = arith.constant 0 : i32
    return %c0_i32, %c0_i32_0 : i32, i32
  }
  func.func @transform_8(%arg0: i32) -> (i32, i32) {
    %c0_i32 = arith.constant 0 : i32
    %c0_i32_0 = arith.constant 0 : i32
    %c0_i32_1 = arith.constant 0 : i32
    return %c0_i32, %c0_i32_0 : i32, i32
  }
  func.func @transform_9(%arg0: i32) -> (i32, i32) {
    %c0_i32 = arith.constant 0 : i32
    %c0_i32_0 = arith.constant 0 : i32
    %c0_i32_1 = arith.constant 0 : i32
    return %c0_i32, %c0_i32_0 : i32, i32
  }
  func.func @transform_10(%arg0: i32) -> (i32, i32) {
    %c0_i32 = arith.constant 0 : i32
    %c0_i32_0 = arith.constant 0 : i32
    %c0_i32_1 = arith.constant 0 : i32
    return %c0_i32, %c0_i32_0 : i32, i32
  }
  func.func @transform_11(%arg0: i32) -> (i32, i32) {
    %c0_i32 = arith.constant 0 : i32
    %c0_i32_0 = arith.constant 0 : i32
    %c0_i32_1 = arith.constant 0 : i32
    return %c0_i32, %c0_i32_0 : i32, i32
  }
  func.func @transform_12(%arg0: i32) -> (i32, i32, i32) {
    %c0_i32 = arith.constant 0 : i32
    %c0_i32_0 = arith.constant 0 : i32
    %c0_i32_1 = arith.constant 0 : i32
    return %arg0, %c0_i32, %c0_i32_0 : i32, i32, i32
  }
}

</mosaic_0001>

<llo_original>
// kernel: block_forward.1
$region0: #{block_forward.1}
  #allocation0 [shape = 'u32[]', space=smem, size = 0x4, offset = 0x4, fixed_abs, tag = 'smem constant byte address 0x4 - core index']
  #allocation1 [shape = 'u32[144,128]{1,0:T(1,128)}', space=vmem, size = 0x12000, scoped, tag = 'internal scratch']
  %s0 = inlined_call_operand.vmem [shape: f32[2,16,64], index: 0, kind: input, shape index: {}]
  %s1 = inlined_call_operand.vmem [shape: f32[1,64], index: 1, kind: input, shape index: {}]
  %s2 = inlined_call_operand.vmem [shape: f32[1,64], index: 2, kind: input, shape index: {}]
  %s3 = inlined_call_operand.vmem [shape: bf16[64,192], index: 3, kind: input, shape index: {}]
  %s4 = inlined_call_operand.vmem [shape: bf16[64,64], index: 4, kind: input, shape index: {}]
  %s5 = inlined_call_operand.vmem [shape: f32[1,64], index: 5, kind: input, shape index: {}]
  %s6 = inlined_call_operand.vmem [shape: f32[1,64], index: 6, kind: input, shape index: {}]
  %s7 = inlined_call_operand.vmem [shape: f32[1,64], index: 7, kind: input, shape index: {}]
  %s8 = inlined_call_operand.vmem [shape: bf16[64,256], index: 8, kind: input, shape index: {}]
  %s9 = inlined_call_operand.vmem [shape: f32[1,256], index: 9, kind: input, shape index: {}]
  %s10 = inlined_call_operand.vmem [shape: bf16[256,64], index: 10, kind: input, shape index: {}]
  %s11 = inlined_call_operand.vmem [shape: f32[1,64], index: 11, kind: input, shape index: {}]
  %s12 = inlined_call_operand.hbm [shape: f32[2,16,64], index: 12, kind: output, shape index: {}]
  %s13 = sld [smem:[#allocation0]]
  $region81: #{block_forward.1} parent=0
    _
  %s15 = ssub.s32 1, %s13
  %s16 = scalar_select 0, %s15, %s13
  $region1: #{block_forward.1} parent=0
    #allocation2 [shape = 'u8[16384]{0}', space=vmem, size = 0x4000, scoped, tag = 'output window, operand 0']
    #allocation3 [shape = 's32[2]{0}', space=sflag, size = 0x8, scoped, tag = 'scoped memory for block_forward.1']
    %17 = vsyncpa [#allocation3], 0
    %s18 = scalar_lea.sflag [#allocation3], 1
    %19 = vsyncpa %s18, 0
    loop: start=0, step=1, limit=4
    $region2: #{block_forward.1} parent=1 // loop_pre_header
      _
    $region3: #{block_forward.1} parent=1 // loop_header
      %s21 = sphi 0, %s25
      %p22 = scmp.ge.s32.totalorder %s21, 4
      %s31 = sphi 0, %s33
      %s34 = sphi 0, %s31
      %s35 = sphi 0, %s34
      %s51 = sphi 0, %s35
      %s55 = sphi 0, %s55
      %s57 = sphi 0, %s55
      %s58 = sphi 0, %s57
      %s72 = sphi 0, %s58
      %s76 = sphi 0, %s76
      %s78 = sphi 0, %s76
      %s79 = sphi 0, %s78
      %s93 = sphi 0, %s79
      %s97 = sphi 0, %s97
      %s99 = sphi 0, %s97
      %s100 = sphi 0, %s99
      %s114 = sphi 0, %s100
      %s118 = sphi 0, %s118
      %s120 = sphi 0, %s118
      %s121 = sphi 0, %s120
      %s135 = sphi 0, %s121
      %s139 = sphi 0, %s139
      %s141 = sphi 0, %s139
      %s142 = sphi 0, %s141
      %s156 = sphi 0, %s142
      %s160 = sphi 0, %s160
      %s162 = sphi 0, %s160
      %s163 = sphi 0, %s162
      %s177 = sphi 0, %s163
      %s181 = sphi 0, %s181
      %s183 = sphi 0, %s181
      %s184 = sphi 0, %s183
      %s198 = sphi 0, %s184
      %s202 = sphi 0, %s202
      %s204 = sphi 0, %s202
      %s205 = sphi 0, %s204
      %s219 = sphi 0, %s205
      %s223 = sphi 0, %s223
      %s225 = sphi 0, %s223
      %s226 = sphi 0, %s225
      %s240 = sphi 0, %s226
      %s244 = sphi 0, %s244
      %s246 = sphi 0, %s244
      %s247 = sphi 0, %s246
      %s261 = sphi 0, %s247
      %s265 = sphi 0, %s265
      %s267 = sphi 0, %s265
      %s268 = sphi 0, %s267
      %s282 = sphi 0, %s268
      %s288 = sphi 0, %s290
      %s291 = sphi 0, %s288
      %s292 = sphi 0, %s291
      %s308 = sphi 0, %s292
    $region4: #{block_forward.1} parent=1 // loop_header_branch
      %24 = sbr.rel (%p22) target = $region8
    $region5: #{block_forward.1} parent=1 // loop_body
      %s26 = ssub.s32 %s21, 1
      %s27 = ssub.s32 %s21, 2
      %s28 = sadd.s32 %s21, 1
      %s29 = ssub.s32 %s21, %s28
      %p30 = scmp.eq.s32.totalorder %s29, 0
      %s32 = sadd.s32 %s31, 1
      %s33 = scalar_select %p30, %s31, %s32
      %p36 = pneg %p30
      %p37 = scmp.eq.s32.totalorder %s21, 1
      %p38 = por %p36, %p37
      %p39 = scmp.ne.s32.totalorder %s31, %s34
      %p40 = scmp.eq.s32.totalorder %s21, 0
      %p41 = por %p39, %p40
      %p42 = scmp.ne.s32.totalorder %s31, %s34
      %p43 = scmp.eq.s32.totalorder %s26, 1
      %p44 = por %p42, %p43
      %p45 = scmp.ne.s32.totalorder %s34, %s35
      %p46 = scmp.eq.s32.totalorder %s26, 0
      %p47 = por %p45, %p46
      %p48 = scmp.ne.s32.totalorder %s34, %s35
      %p49 = scmp.eq.s32.totalorder %s27, 1
      %p50 = por %p48, %p49
      %p52 = scmp.ne.s32.totalorder %s35, %s51
      %p53 = scmp.eq.s32.totalorder %s27, 0
      %p54 = por %p52, %p53
      %s56 = sadd.s32 %s55, 1
      %p59 = scmp.eq.s32.totalorder %s21, 1
      %p60 = scmp.ne.s32.totalorder %s55, %s57
      %p61 = scmp.eq.s32.totalorder %s21, 0
      %p62 = por %p60, %p61
      %p63 = scmp.ne.s32.totalorder %s55, %s57
      %p64 = scmp.eq.s32.totalorder %s26, 1
      %p65 = por %p63, %p64
      %p66 = scmp.ne.s32.totalorder %s57, %s58
      %p67 = scmp.eq.s32.totalorder %s26, 0
      %p68 = por %p66, %p67
      %p69 = scmp.ne.s32.totalorder %s57, %s58
      %p70 = scmp.eq.s32.totalorder %s27, 1
      %p71 = por %p69, %p70
      %p73 = scmp.ne.s32.totalorder %s58, %s72
      %p74 = scmp.eq.s32.totalorder %s27, 0
      %p75 = por %p73, %p74
      %s77 = sadd.s32 %s76, 1
      %p80 = scmp.eq.s32.totalorder %s21, 1
      %p81 = scmp.ne.s32.totalorder %s76, %s78
      %p82 = scmp.eq.s32.totalorder %s21, 0
      %p83 = por %p81, %p82
      %p84 = scmp.ne.s32.totalorder %s76, %s78
      %p85 = scmp.eq.s32.totalorder %s26, 1
      %p86 = por %p84, %p85
      %p87 = scmp.ne.s32.totalorder %s78, %s79
      %p88 = scmp.eq.s32.totalorder %s26, 0
      %p89 = por %p87, %p88
      %p90 = scmp.ne.s32.totalorder %s78, %s79
      %p91 = scmp.eq.s32.totalorder %s27, 1
      %p92 = por %p90, %p91
      %p94 = scmp.ne.s32.totalorder %s79, %s93
      %p95 = scmp.eq.s32.totalorder %s27, 0
      %p96 = por %p94, %p95
      %s98 = sadd.s32 %s97, 1
      %p101 = scmp.eq.s32.totalorder %s21, 1
      %p102 = scmp.ne.s32.totalorder %s97, %s99
      %p103 = scmp.eq.s32.totalorder %s21, 0
      %p104 = por %p102, %p103
      %p105 = scmp.ne.s32.totalorder %s97, %s99
      %p106 = scmp.eq.s32.totalorder %s26, 1
      %p107 = por %p105, %p106
      %p108 = scmp.ne.s32.totalorder %s99, %s100
      %p109 = scmp.eq.s32.totalorder %s26, 0
      %p110 = por %p108, %p109
      %p111 = scmp.ne.s32.totalorder %s99, %s100
      %p112 = scmp.eq.s32.totalorder %s27, 1
      %p113 = por %p111, %p112
      %p115 = scmp.ne.s32.totalorder %s100, %s114
      %p116 = scmp.eq.s32.totalorder %s27, 0
      %p117 = por %p115, %p116
      %s119 = sadd.s32 %s118, 1
      %p122 = scmp.eq.s32.totalorder %s21, 1
      %p123 = scmp.ne.s32.totalorder %s118, %s120
      %p124 = scmp.eq.s32.totalorder %s21, 0
      %p125 = por %p123, %p124
      %p126 = scmp.ne.s32.totalorder %s118, %s120
      %p127 = scmp.eq.s32.totalorder %s26, 1
      %p128 = por %p126, %p127
      %p129 = scmp.ne.s32.totalorder %s120, %s121
      %p130 = scmp.eq.s32.totalorder %s26, 0
      %p131 = por %p129, %p130
      %p132 = scmp.ne.s32.totalorder %s120, %s121
      %p133 = scmp.eq.s32.totalorder %s27, 1
      %p134 = por %p132, %p133
      %p136 = scmp.ne.s32.totalorder %s121, %s135
      %p137 = scmp.eq.s32.totalorder %s27, 0
      %p138 = por %p136, %p137
      %s140 = sadd.s32 %s139, 1
      %p143 = scmp.eq.s32.totalorder %s21, 1
      %p144 = scmp.ne.s32.totalorder %s139, %s141
      %p145 = scmp.eq.s32.totalorder %s21, 0
      %p146 = por %p144, %p145
      %p147 = scmp.ne.s32.totalorder %s139, %s141
      %p148 = scmp.eq.s32.totalorder %s26, 1
      %p149 = por %p147, %p148
      %p150 = scmp.ne.s32.totalorder %s141, %s142
      %p151 = scmp.eq.s32.totalorder %s26, 0
      %p152 = por %p150, %p151
      %p153 = scmp.ne.s32.totalorder %s141, %s142
      %p154 = scmp.eq.s32.totalorder %s27, 1
      %p155 = por %p153, %p154
      %p157 = scmp.ne.s32.totalorder %s142, %s156
      %p158 = scmp.eq.s32.totalorder %s27, 0
      %p159 = por %p157, %p158
      %s161 = sadd.s32 %s160, 1
      %p164 = scmp.eq.s32.totalorder %s21, 1
      %p165 = scmp.ne.s32.totalorder %s160, %s162
      %p166 = scmp.eq.s32.totalorder %s21, 0
      %p167 = por %p165, %p166
      %p168 = scmp.ne.s32.totalorder %s160, %s162
      %p169 = scmp.eq.s32.totalorder %s26, 1
      %p170 = por %p168, %p169
      %p171 = scmp.ne.s32.totalorder %s162, %s163
      %p172 = scmp.eq.s32.totalorder %s26, 0
      %p173 = por %p171, %p172
      %p174 = scmp.ne.s32.totalorder %s162, %s163
      %p175 = scmp.eq.s32.totalorder %s27, 1
      %p176 = por %p174, %p175
      %p178 = scmp.ne.s32.totalorder %s163, %s177
      %p179 = scmp.eq.s32.totalorder %s27, 0
      %p180 = por %p178, %p179
      %s182 = sadd.s32 %s181, 1
      %p185 = scmp.eq.s32.totalorder %s21, 1
      %p186 = scmp.ne.s32.totalorder %s181, %s183
      %p187 = scmp.eq.s32.totalorder %s21, 0
      %p188 = por %p186, %p187
      %p189 = scmp.ne.s32.totalorder %s181, %s183
      %p190 = scmp.eq.s32.totalorder %s26, 1
      %p191 = por %p189, %p190
      %p192 = scmp.ne.s32.totalorder %s183, %s184
      %p193 = scmp.eq.s32.totalorder %s26, 0
      %p194 = por %p192, %p193
      %p195 = scmp.ne.s32.totalorder %s183, %s184
      %p196 = scmp.eq.s32.totalorder %s27, 1
      %p197 = por %p195, %p196
      %p199 = scmp.ne.s32.totalorder %s184, %s198
      %p200 = scmp.eq.s32.totalorder %s27, 0
      %p201 = por %p199, %p200
      %s203 = sadd.s32 %s202, 1
      %p206 = scmp.eq.s32.totalorder %s21, 1
      %p207 = scmp.ne.s32.totalorder %s202, %s204
      %p208 = scmp.eq.s32.totalorder %s21, 0
      %p209 = por %p207, %p208
      %p210 = scmp.ne.s32.totalorder %s202, %s204
      %p211 = scmp.eq.s32.totalorder %s26, 1
      %p212 = por %p210, %p211
      %p213 = scmp.ne.s32.totalorder %s204, %s205
      %p214 = scmp.eq.s32.totalorder %s26, 0
      %p215 = por %p213, %p214
      %p216 = scmp.ne.s32.totalorder %s204, %s205
      %p217 = scmp.eq.s32.totalorder %s27, 1
      %p218 = por %p216, %p217
      %p220 = scmp.ne.s32.totalorder %s205, %s219
      %p221 = scmp.eq.s32.totalorder %s27, 0
      %p222 = por %p220, %p221
      %s224 = sadd.s32 %s223, 1
      %p227 = scmp.eq.s32.totalorder %s21, 1
      %p228 = scmp.ne.s32.totalorder %s223, %s225
      %p229 = scmp.eq.s32.totalorder %s21, 0
      %p230 = por %p228, %p229
      %p231 = scmp.ne.s32.totalorder %s223, %s225
      %p232 = scmp.eq.s32.totalorder %s26, 1
      %p233 = por %p231, %p232
      %p234 = scmp.ne.s32.totalorder %s225, %s226
      %p235 = scmp.eq.s32.totalorder %s26, 0
      %p236 = por %p234, %p235
      %p237 = scmp.ne.s32.totalorder %s225, %s226
      %p238 = scmp.eq.s32.totalorder %s27, 1
      %p239 = por %p237, %p238
      %p241 = scmp.ne.s32.totalorder %s226, %s240
      %p242 = scmp.eq.s32.totalorder %s27, 0
      %p243 = por %p241, %p242
      %s245 = sadd.s32 %s244, 1
      %p248 = scmp.eq.s32.totalorder %s21, 1
      %p249 = scmp.ne.s32.totalorder %s244, %s246
      %p250 = scmp.eq.s32.totalorder %s21, 0
      %p251 = por %p249, %p250
      %p252 = scmp.ne.s32.totalorder %s244, %s246
      %p253 = scmp.eq.s32.totalorder %s26, 1
      %p254 = por %p252, %p253
      %p255 = scmp.ne.s32.totalorder %s246, %s247
      %p256 = scmp.eq.s32.totalorder %s26, 0
      %p257 = por %p255, %p256
      %p258 = scmp.ne.s32.totalorder %s246, %s247
      %p259 = scmp.eq.s32.totalorder %s27, 1
      %p260 = por %p258, %p259
      %p262 = scmp.ne.s32.totalorder %s247, %s261
      %p263 = scmp.eq.s32.totalorder %s27, 0
      %p264 = por %p262, %p263
      %s266 = sadd.s32 %s265, 1
      %p269 = scmp.eq.s32.totalorder %s21, 1
      %p270 = scmp.ne.s32.totalorder %s265, %s267
      %p271 = scmp.eq.s32.totalorder %s21, 0
      %p272 = por %p270, %p271
      %p273 = scmp.ne.s32.totalorder %s265, %s267
      %p274 = scmp.eq.s32.totalorder %s26, 1
      %p275 = por %p273, %p274
      %p276 = scmp.ne.s32.totalorder %s267, %s268
      %p277 = scmp.eq.s32.totalorder %s26, 0
      %p278 = por %p276, %p277
      %p279 = scmp.ne.s32.totalorder %s267, %s268
      %p280 = scmp.eq.s32.totalorder %s27, 1
      %p281 = por %p279, %p280
      %p283 = scmp.ne.s32.totalorder %s268, %s282
      %p284 = scmp.eq.s32.totalorder %s27, 0
      %p285 = por %p283, %p284
      %s286 = ssub.s32 %s21, %s28
      %p287 = scmp.eq.s32.totalorder %s286, 0
      %s289 = sadd.s32 %s288, 1
      %s290 = scalar_select %p287, %s288, %s289
      %p293 = pneg %p287
      %p294 = scmp.eq.s32.totalorder %s21, 1
      %p295 = por %p293, %p294
      %p296 = scmp.ne.s32.totalorder %s288, %s291
      %p297 = scmp.eq.s32.totalorder %s21, 0
      %p298 = por %p296, %p297
      %p299 = scmp.ne.s32.totalorder %s288, %s291
      %p300 = scmp.eq.s32.totalorder %s26, 1
      %p301 = por %p299, %p300
      %p302 = scmp.ne.s32.totalorder %s291, %s292
      %p303 = scmp.eq.s32.totalorder %s26, 0
      %p304 = por %p302, %p303
      %p305 = scmp.ne.s32.totalorder %s291, %s292
      %p306 = scmp.eq.s32.totalorder %s27, 1
      %p307 = por %p305, %p306
      %p309 = scmp.ne.s32.totalorder %s292, %s308
      %p310 = scmp.eq.s32.totalorder %s27, 0
      %p311 = por %p309, %p310
      %p312 = scmp.le.s32.totalorder 1, %s21
      %p313 = scmp.lt.s32.totalorder %s21, 3
      %p314 = pnand %p312, %p313
      %p315 = pneg %p314
      // Predicated region
      $region9: #{block_forward.1} parent=5 // pred_check
        _
      $region10: #{block_forward.1} parent=5 // pred_check_branch
        %317 = sbr.rel (%p314) target = $region12
      $region11: #{block_forward.1} parent=5 // pred_region
        %s318 = ssub.s32 %s21, 1
        // Predicated region
        $region13: #{block_forward.1} parent=11 // pred_check
          %p319 = pneg %p68
        $region14: #{block_forward.1} parent=11 // pred_check_branch
          %321 = sbr.rel (%p319) target = $region16
        $region15: #{block_forward.1} parent=11 // pred_region
          _
        $region16: #{block_forward.1} parent=11 // pred_fallthru
          _
        // Predicated region
        $region17: #{block_forward.1} parent=11 // pred_check
          %p322 = pneg %p89
        $region18: #{block_forward.1} parent=11 // pred_check_branch
          %324 = sbr.rel (%p322) target = $region20
        $region19: #{block_forward.1} parent=11 // pred_region
          _
        $region20: #{block_forward.1} parent=11 // pred_fallthru
          _
        // Predicated region
        $region21: #{block_forward.1} parent=11 // pred_check
          %p325 = pneg %p110
        $region22: #{block_forward.1} parent=11 // pred_check_branch
          %327 = sbr.rel (%p325) target = $region24
        $region23: #{block_forward.1} parent=11 // pred_region
          _
        $region24: #{block_forward.1} parent=11 // pred_fallthru
          _
        // Predicated region
        $region25: #{block_forward.1} parent=11 // pred_check
          %p328 = pneg %p131
        $region26: #{block_forward.1} parent=11 // pred_check_branch
          %330 = sbr.rel (%p328) target = $region28
        $region27: #{block_forward.1} parent=11 // pred_region
          _
        $region28: #{block_forward.1} parent=11 // pred_fallthru
          _
        // Predicated region
        $region29: #{block_forward.1} parent=11 // pred_check
          %p331 = pneg %p152
        $region30: #{block_forward.1} parent=11 // pred_check_branch
          %333 = sbr.rel (%p331) target = $region32
        $region31: #{block_forward.1} parent=11 // pred_region
          _
        $region32: #{block_forward.1} parent=11 // pred_fallthru
          _
        // Predicated region
        $region33: #{block_forward.1} parent=11 // pred_check
          %p334 = pneg %p173
        $region34: #{block_forward.1} parent=11 // pred_check_branch
          %336 = sbr.rel (%p334) target = $region36
        $region35: #{block_forward.1} parent=11 // pred_region
          _
        $region36: #{block_forward.1} parent=11 // pred_fallthru
          _
        // Predicated region
        $region37: #{block_forward.1} parent=11 // pred_check
          %p337 = pneg %p194
        $region38: #{block_forward.1} parent=11 // pred_check_branch
          %339 = sbr.rel (%p337) target = $region40
        $region39: #{block_forward.1} parent=11 // pred_region
          _
        $region40: #{block_forward.1} parent=11 // pred_fallthru
          _
        // Predicated region
        $region41: #{block_forward.1} parent=11 // pred_check
          %p340 = pneg %p215
        $region42: #{block_forward.1} parent=11 // pred_check_branch
          %342 = sbr.rel (%p340) target = $region44
        $region43: #{block_forward.1} parent=11 // pred_region
          _
        $region44: #{block_forward.1} parent=11 // pred_fallthru
          _
        // Predicated region
        $region45: #{block_forward.1} parent=11 // pred_check
          %p343 = pneg %p236
        $region46: #{block_forward.1} parent=11 // pred_check_branch
          %345 = sbr.rel (%p343) target = $region48
        $region47: #{block_forward.1} parent=11 // pred_region
          _
        $region48: #{block_forward.1} parent=11 // pred_fallthru
          _
        // Predicated region
        $region49: #{block_forward.1} parent=11 // pred_check
          %p346 = pneg %p257
        $region50: #{block_forward.1} parent=11 // pred_check_branch
          %348 = sbr.rel (%p346) target = $region52
        $region51: #{block_forward.1} parent=11 // pred_region
          _
        $region52: #{block_forward.1} parent=11 // pred_fallthru
          _
        // Predicated region
        $region53: #{block_forward.1} parent=11 // pred_check
          %p349 = pneg %p278
        $region54: #{block_forward.1} parent=11 // pred_check_branch
          %351 = sbr.rel (%p349) target = $region56
        $region55: #{block_forward.1} parent=11 // pred_region
          _
        $region56: #{block_forward.1} parent=11 // pred_fallthru
          _
      $region12: #{block_forward.1} parent=5 // pred_fallthru
        _
      %p352 = scmp.lt.s32.totalorder %s21, 2
      // Predicated region
      $region57: #{block_forward.1} parent=5 // pred_check
        %p353 = pneg %p352
      $region58: #{block_forward.1} parent=5 // pred_check_branch
        %355 = sbr.rel (%p353) target = $region60
      $region59: #{block_forward.1} parent=5 // pred_region
        // Predicated region
        $region61: #{block_forward.1} parent=59 // pred_check
          %p356 = pneg %p41
        $region62: #{block_forward.1} parent=59 // pred_check_branch
          %358 = sbr.rel (%p356) target = $region64
        $region63: #{block_forward.1} parent=59 // pred_region
          %p359 = scmp.lt.s32.totalorder %s21, 1
          %s360 = scalar_select %p359, %s21, 1
          %s361 = smul.addr %s360, 2
          %s362 = smul.addr %s361, 8
          %s363 = scalar_lea.vmem %s0, %s362
        $region64: #{block_forward.1} parent=59 // pred_fallthru
          _
      $region60: #{block_forward.1} parent=5 // pred_fallthru
        _
      %p364 = scmp.le.s32.totalorder 1, %s21
      %p365 = scmp.lt.s32.totalorder %s21, 3
      %p366 = pnand %p364, %p365
      %p367 = pneg %p366
      // Predicated region
      $region65: #{block_forward.1} parent=5 // pred_check
        _
      $region66: #{block_forward.1} parent=5 // pred_check_branch
        %369 = sbr.rel (%p366) target = $region68
      $region67: #{block_forward.1} parent=5 // pred_region
        %s370 = ssub.s32 %s21, 1
        %p371 = scmp.lt.s32.totalorder %s26, 1
        %s372 = scalar_select %p371, %s26, 1
        %s373 = smul.addr %s372, 2
        %s374 = smul.addr %s373, 8
        %s375 = scalar_lea.vmem %s0, %s374
        %p376 = pneg %p47
        %p377 = pneg %p44
        %p378 = pneg %p68
        %p379 = pneg %p65
        %p380 = pneg %p89
        %p381 = pneg %p86
        %p382 = pneg %p110
        %p383 = pneg %p107
        %p384 = pneg %p131
        %p385 = pneg %p128
        %p386 = pneg %p152
        %p387 = pneg %p149
        %p388 = pneg %p173
        %p389 = pneg %p170
        %p390 = pneg %p194
        %p391 = pneg %p191
        %p392 = pneg %p215
        %p393 = pneg %p212
        %p394 = pneg %p236
        %p395 = pneg %p233
        %p396 = pneg %p257
        %p397 = pneg %p254
        %p398 = pneg %p278
        %p399 = pneg %p275
        %p400 = pneg %p304
        %p401 = pneg %p301
        %s402 = sand.u32 %s291, 1
        %s403 = scalar_lea.sflag [#allocation3], %s402
        %s404 = sand.u32 %s291, 1
        %s405 = smul.addr %s404, 16
        %s406 = scalar_lea.vmem [#allocation2], %s405
        %p407 = scmp.lt.s32.totalorder %s26, 1
        %s408 = scalar_select %p407, %s26, 1
        %s409 = smul.addr %s408, 2
        %s410 = smul.addr %s409, 8
        %s411 = scalar_lea.vmem %s0, %s410
        %v413 = vld [vmem:[%s411] sm:$0xff]
        %v414 = vld [vmem:[%s411 + $0x8] sm:$0xff]
        %vm415 = vcmask 523264
        %v416 = vsel %vm415, %v413, 0.0
        %417 = vadd.xlane.f32.xlu0 %v416
        %v418 = vpop.xlane.xlu0 %417
        %v419 = vsel %vm415, %v414, 0.0
        %420 = vadd.xlane.f32.xlu0 %v419
        %v421 = vpop.xlane.xlu0 %420
        %v422 = vrcp.pop 64.0
        %v423 = vmul.f32 %v418, %v422
        %v424 = vmul.f32 %v421, %v422
        %v425 = vsub.f32 %v413, %v423
        %v426 = vsub.f32 %v414, %v424
        %v427 = vmul.f32 %v425, %v425
        %v428 = vmul.f32 %v426, %v426
        %v429 = vsel %vm415, %v427, 0.0
        %430 = vadd.xlane.f32.xlu0 %v429
        %v431 = vpop.xlane.xlu0 %430
        %v432 = vsel %vm415, %v428, 0.0
        %433 = vadd.xlane.f32.xlu0 %v432
        %v434 = vpop.xlane.xlu0 %433
        %v435 = vmul.f32 %v431, %v422
        %v436 = vmul.f32 %v434, %v422
        %v437 = vadd.f32 %v435, 1e-06
        %v438 = vadd.f32 %v436, 1e-06
        %v439 = vrsqrt.pop %v437
        %v440 = vrsqrt.pop %v438
        %v441 = vmul.f32 %v425, %v439
        %v442 = vmul.f32 %v426, %v440
        %v443 = vld [vmem:[%s1] sm:$0x1]
        %v445 = vlaneseq
        %v446 = vshrl.u32 %v445, 7
        %v447 = vsub.s32 0, %v446
        %v448 = vrot.slane %v443, %v447
        %v450 = vmul.f32 %v441, %v448
        %v451 = vmul.f32 %v442, %v448
        %v452 = vld [vmem:[%s2] sm:$0x1]
        %v454 = vlaneseq
        %v455 = vshrl.u32 %v454, 7
        %v456 = vsub.s32 0, %v455
        %v457 = vrot.slane %v452, %v456
        %v459 = vadd.f32 %v450, %v457
        %v460 = vadd.f32 %v451, %v457
        %v461 = vpack.c.bf16 %v460, %v459
        %v462 = vld [vmem:[%s3] sm:$0xff]
        %v463 = vld [vmem:[%s3 + $0x8] sm:$0xff]
        %v464 = vld [vmem:[%s3 + $0x10] sm:$0xff]
        %v465 = vld [vmem:[%s3 + $0x18] sm:$0xff]
        %v466 = vld [vmem:[%s3 + $0x20] sm:$0xff]
        %v467 = vld [vmem:[%s3 + $0x28] sm:$0xff]
        %v468 = vld [vmem:[%s3 + $0x30] sm:$0xff]
        %v469 = vld [vmem:[%s3 + $0x38] sm:$0xff]
        %v478 = vunpack.c.l.b16 %v462
        %v479 = vunpack.c.h.b16 %v462
        %v480 = vunpack.c.l.b16 %v463
        %v481 = vunpack.c.h.b16 %v463
        %v482 = vunpack.c.l.b16 %v464
        %v483 = vunpack.c.h.b16 %v464
        %v484 = vunpack.c.l.b16 %v465
        %v485 = vunpack.c.h.b16 %v465
        %v486 = vunpack.c.l.b16 %v466
        %v487 = vunpack.c.h.b16 %v466
        %v488 = vunpack.c.l.b16 %v467
        %v489 = vunpack.c.h.b16 %v467
        %v490 = vunpack.c.l.b16 %v468
        %v491 = vunpack.c.h.b16 %v468
        %v492 = vunpack.c.l.b16 %v469
        %v493 = vunpack.c.h.b16 %v469
        %v494 = vpack.c.b16 %v480, %v478
        %v495 = vpack.c.b16 %v481, %v479
        %v496 = vpack.c.b16 %v484, %v482
        %v497 = vpack.c.b16 %v485, %v483
        %v498 = vpack.c.b16 %v488, %v486
        %v499 = vpack.c.b16 %v489, %v487
        %v500 = vpack.c.b16 %v492, %v490
        %v501 = vpack.c.b16 %v493, %v491
        %v511 = vsel %vm415, %v461, 0
        %513 = vmatprep.subr.bf16.mxu0 %v495
        %514 = vmatpush1.bf16.msra.mxu0 %v494
        %515 = vmatprep.subr.bf16.mxu0 %v497
        %516 = vmatpush1.bf16.msra.mxu0 %v496
        %517 = vmatprep.subr.bf16.mxu0 %v499
        %518 = vmatpush1.bf16.msra.mxu0 %v498
        %519 = vmatprep.subr.bf16.mxu0 %v501
        %520 = vmatpush1.bf16.msra.mxu0 %v500
        %521 = vmatprep.subr.bf16.mxu0 0
        %522 = vmatpush1.bf16.msra.mxu0 0
        %523 = vmatprep.subr.bf16.mxu0 0
        %524 = vmatpush1.bf16.msra.mxu0 0
        %525 = vmatprep.subr.bf16.mxu0 0
        %526 = vmatpush1.bf16.msra.mxu0 0
        %527 = vmatprep.subr.bf16.mxu0 0
        %528 = vmatpush1.bf16.msra.mxu0 0
        %529 = vmatprep.subr.bf16.mxu0 0
        %530 = vmatpush1.bf16.msra.mxu0 0
        %531 = vmatprep.subr.bf16.mxu0 0
        %532 = vmatpush1.bf16.msra.mxu0 0
        %533 = vmatprep.subr.bf16.mxu0 0
        %534 = vmatpush1.bf16.msra.mxu0 0
        %535 = vmatprep.subr.bf16.mxu0 0
        %536 = vmatpush1.bf16.msra.mxu0 0
        %537 = vmatprep.subr.bf16.mxu0 0
        %538 = vmatpush1.bf16.msra.mxu0 0
        %539 = vmatprep.subr.bf16.mxu0 0
        %540 = vmatpush1.bf16.msra.mxu0 0
        %541 = vmatprep.subr.bf16.mxu0 0
        %542 = vmatpush1.bf16.msra.mxu0 0
        %543 = vmatprep.subr.bf16.mxu0 0
        %544 = vmatpush1.bf16.msra.mxu0 0
        %545 = vmatprep.mubr.bf16.mxu0 0
        %546 = vmatmul.mubr.bf16.gmra.mrb[0].mxu0 %v511
        %v547 = vpop.f32.mrb[0].mxu0
        %v548 = vadd.f32 0.0, %v547
        %v549 = vpop.f32.mrb[0].mxu0
        %v550 = vadd.f32 0.0, %v549
        %v551 = vpop.f32.mrb[0].mxu0
        %v552 = vadd.f32 0.0, %v551
        %v553 = vpop.f32.mrb[0].mxu0
        %v554 = vadd.f32 0.0, %v553
        %555 = vdwg.mxu0
        %v556 = vmul.f32 %v548, 0.25
        %v557 = vmul.f32 %v552, 0.25
        %v558 = vpack.c.bf16 %v557, %v556
        %560 = vrot.lane.b32.xlu0 %v558, 112
        %v561 = vpop.permute.xlu0 %560
        %562 = vrot.lane.b32.xlu0 %v558, 96
        %v563 = vpop.permute.xlu0 %562
        %564 = vrot.lane.b32.xlu0 %v558, 80
        %v565 = vpop.permute.xlu0 %564
        %v566 = vpack.c.bf16 %v552, %v548
        %568 = vrot.lane.b32.xlu0 %v566, 112
        %v569 = vpop.permute.xlu0 %568
        %570 = vrot.lane.b32.xlu0 %v566, 96
        %v571 = vpop.permute.xlu0 %570
        %572 = vrot.lane.b32.xlu0 %v566, 80
        %v573 = vpop.permute.xlu0 %572
        %v574 = vpack.c.bf16 %v554, %v550
        %576 = vrot.lane.b32.xlu0 %v574, 112
        %v577 = vpop.permute.xlu0 %576
        %579 = vrot.lane.b32.xlu0 %v574, 96
        %v580 = vpop.permute.xlu0 %579
        %582 = vrot.lane.b32.xlu0 %v574, 80
        %v583 = vpop.permute.xlu0 %582
        %585 = vrot.lane.b32.xlu0 %v566, 64
        %v586 = vpop.permute.xlu0 %585
        %587 = vrot.lane.b32.xlu0 %v569, 64
        %v588 = vpop.permute.xlu0 %587
        %589 = vrot.lane.b32.xlu0 %v571, 64
        %v590 = vpop.permute.xlu0 %589
        %591 = vrot.lane.b32.xlu0 %v573, 64
        %v592 = vpop.permute.xlu0 %591
        %597 = vxpose.xlu0.c.b16.start [1/8] %v586, 128
        %598 = vxpose.xlu0.c.b16.cont [2/8] 0, 128
        %599 = vxpose.xlu0.c.b16.cont [3/8] 0, 128
        %600 = vxpose.xlu0.c.b16.cont [4/8] 0, 128
        %601 = vxpose.xlu0.c.b16.cont [5/8] 0, 128
        %602 = vxpose.xlu0.c.b16.cont [6/8] 0, 128
        %603 = vxpose.xlu0.c.b16.cont [7/8] 0, 128
        %604 = vxpose.xlu0.c.b16.end [8/8] 0, 128
        %v605 = vpop.trf.xlu0
        %v606 = vpop.trf.xlu0
        %v607 = vpop.trf.xlu0
        %v608 = vpop.trf.xlu0
        %v609 = vpop.trf.xlu0
        %v610 = vpop.trf.xlu0
        %v611 = vpop.trf.xlu0
        %v612 = vpop.trf.xlu0
        %613 = vxpose.xlu0.c.b16.start [1/8] %v588, 128
        %614 = vxpose.xlu0.c.b16.cont [2/8] 0, 128
        %615 = vxpose.xlu0.c.b16.cont [3/8] 0, 128
        %616 = vxpose.xlu0.c.b16.cont [4/8] 0, 128
        %617 = vxpose.xlu0.c.b16.cont [5/8] 0, 128
        %618 = vxpose.xlu0.c.b16.cont [6/8] 0, 128
        %619 = vxpose.xlu0.c.b16.cont [7/8] 0, 128
        %620 = vxpose.xlu0.c.b16.end [8/8] 0, 128
        %v621 = vpop.trf.xlu0
        %v622 = vpop.trf.xlu0
        %v623 = vpop.trf.xlu0
        %v624 = vpop.trf.xlu0
        %v625 = vpop.trf.xlu0
        %v626 = vpop.trf.xlu0
        %v627 = vpop.trf.xlu0
        %v628 = vpop.trf.xlu0
        %629 = vxpose.xlu0.c.b16.start [1/8] %v590, 128
        %630 = vxpose.xlu0.c.b16.cont [2/8] 0, 128
        %631 = vxpose.xlu0.c.b16.cont [3/8] 0, 128
        %632 = vxpose.xlu0.c.b16.cont [4/8] 0, 128
        %633 = vxpose.xlu0.c.b16.cont [5/8] 0, 128
        %634 = vxpose.xlu0.c.b16.cont [6/8] 0, 128
        %635 = vxpose.xlu0.c.b16.cont [7/8] 0, 128
        %636 = vxpose.xlu0.c.b16.end [8/8] 0, 128
        %v637 = vpop.trf.xlu0
        %v638 = vpop.trf.xlu0
        %v639 = vpop.trf.xlu0
        %v640 = vpop.trf.xlu0
        %v641 = vpop.trf.xlu0
        %v642 = vpop.trf.xlu0
        %v643 = vpop.trf.xlu0
        %v644 = vpop.trf.xlu0
        %645 = vxpose.xlu0.c.b16.start [1/8] %v592, 128
        %646 = vxpose.xlu0.c.b16.cont [2/8] 0, 128
        %647 = vxpose.xlu0.c.b16.cont [3/8] 0, 128
        %648 = vxpose.xlu0.c.b16.cont [4/8] 0, 128
        %649 = vxpose.xlu0.c.b16.cont [5/8] 0, 128
        %650 = vxpose.xlu0.c.b16.cont [6/8] 0, 128
        %651 = vxpose.xlu0.c.b16.cont [7/8] 0, 128
        %652 = vxpose.xlu0.c.b16.end [8/8] 0, 128
        %v653 = vpop.trf.xlu0
        %v654 = vpop.trf.xlu0
        %v655 = vpop.trf.xlu0
        %v656 = vpop.trf.xlu0
        %v657 = vpop.trf.xlu0
        %v658 = vpop.trf.xlu0
        %v659 = vpop.trf.xlu0
        %v660 = vpop.trf.xlu0
        %vm661 = vcmask 130048
        %v663 = vsel %vm661, %v558, 0
        %665 = vmatprep.subr.bf16.mxu0 0
        %666 = vmatpush1.bf16.msra.mxu0 %v605
        %667 = vmatprep.subr.bf16.mxu0 0
        %668 = vmatpush1.bf16.msra.mxu0 0
        %669 = vmatprep.subr.bf16.mxu0 0
        %670 = vmatpush1.bf16.msra.mxu0 0
        %671 = vmatprep.subr.bf16.mxu0 0
        %672 = vmatpush1.bf16.msra.mxu0 0
        %673 = vmatprep.subr.bf16.mxu0 0
        %674 = vmatpush1.bf16.msra.mxu0 0
        %675 = vmatprep.subr.bf16.mxu0 0
        %676 = vmatpush1.bf16.msra.mxu0 0
        %677 = vmatprep.subr.bf16.mxu0 0
        %678 = vmatpush1.bf16.msra.mxu0 0
        %679 = vmatprep.subr.bf16.mxu0 0
        %680 = vmatpush1.bf16.msra.mxu0 0
        %681 = vmatprep.subr.bf16.mxu0 0
        %682 = vmatpush1.bf16.msra.mxu0 0
        %683 = vmatprep.subr.bf16.mxu0 0
        %684 = vmatpush1.bf16.msra.mxu0 0
        %685 = vmatprep.subr.bf16.mxu0 0
        %686 = vmatpush1.bf16.msra.mxu0 0
        %687 = vmatprep.subr.bf16.mxu0 0
        %688 = vmatpush1.bf16.msra.mxu0 0
        %689 = vmatprep.subr.bf16.mxu0 0
        %690 = vmatpush1.bf16.msra.mxu0 0
        %691 = vmatprep.subr.bf16.mxu0 0
        %692 = vmatpush1.bf16.msra.mxu0 0
        %693 = vmatprep.subr.bf16.mxu0 0
        %694 = vmatpush1.bf16.msra.mxu0 0
        %695 = vmatprep.subr.bf16.mxu0 0
        %696 = vmatpush1.bf16.msra.mxu0 0
        %697 = vmatprep.mubr.bf16.mxu0 0
        %698 = vmatmul.mubr.bf16.gmra.mrb[0].mxu0 %v663
        %v699 = vpop.f32.mrb[0].mxu0
        %v700 = vadd.f32 0.0, %v699
        %v701 = vpop.f32.mrb[0].mxu0
        %v702 = vpop.f32.mrb[0].mxu0
        %v703 = vadd.f32 0.0, %v702
        %v704 = vpop.f32.mrb[0].mxu0
        %705 = vdwg.mxu0
        %v707 = vsel %vm661, %v561, 0
        %709 = vmatprep.subr.bf16.mxu0 0
        %710 = vmatpush1.bf16.msra.mxu0 %v621
        %711 = vmatprep.subr.bf16.mxu0 0
        %712 = vmatpush1.bf16.msra.mxu0 0
        %713 = vmatprep.subr.bf16.mxu0 0
        %714 = vmatpush1.bf16.msra.mxu0 0
        %715 = vmatprep.subr.bf16.mxu0 0
        %716 = vmatpush1.bf16.msra.mxu0 0
        %717 = vmatprep.subr.bf16.mxu0 0
        %718 = vmatpush1.bf16.msra.mxu0 0
        %719 = vmatprep.subr.bf16.mxu0 0
        %720 = vmatpush1.bf16.msra.mxu0 0
        %721 = vmatprep.subr.bf16.mxu0 0
        %722 = vmatpush1.bf16.msra.mxu0 0
        %723 = vmatprep.subr.bf16.mxu0 0
        %724 = vmatpush1.bf16.msra.mxu0 0
        %725 = vmatprep.subr.bf16.mxu0 0
        %726 = vmatpush1.bf16.msra.mxu0 0
        %727 = vmatprep.subr.bf16.mxu0 0
        %728 = vmatpush1.bf16.msra.mxu0 0
        %729 = vmatprep.subr.bf16.mxu0 0
        %730 = vmatpush1.bf16.msra.mxu0 0
        %731 = vmatprep.subr.bf16.mxu0 0
        %732 = vmatpush1.bf16.msra.mxu0 0
        %733 = vmatprep.subr.bf16.mxu0 0
        %734 = vmatpush1.bf16.msra.mxu0 0
        %735 = vmatprep.subr.bf16.mxu0 0
        %736 = vmatpush1.bf16.msra.mxu0 0
        %737 = vmatprep.subr.bf16.mxu0 0
        %738 = vmatpush1.bf16.msra.mxu0 0
        %739 = vmatprep.subr.bf16.mxu0 0
        %740 = vmatpush1.bf16.msra.mxu0 0
        %741 = vmatprep.mubr.bf16.mxu0 0
        %742 = vmatmul.mubr.bf16.gmra.mrb[0].mxu0 %v707
        %v743 = vpop.f32.mrb[0].mxu0
        %v744 = vadd.f32 0.0, %v743
        %v745 = vpop.f32.mrb[0].mxu0
        %v746 = vpop.f32.mrb[0].mxu0
        %v747 = vadd.f32 0.0, %v746
        %v748 = vpop.f32.mrb[0].mxu0
        %749 = vdwg.mxu0
        %v751 = vsel %vm661, %v563, 0
        %753 = vmatprep.subr.bf16.mxu0 0
        %754 = vmatpush1.bf16.msra.mxu0 %v637
        %755 = vmatprep.subr.bf16.mxu0 0
        %756 = vmatpush1.bf16.msra.mxu0 0
        %757 = vmatprep.subr.bf16.mxu0 0
        %758 = vmatpush1.bf16.msra.mxu0 0
        %759 = vmatprep.subr.bf16.mxu0 0
        %760 = vmatpush1.bf16.msra.mxu0 0
        %761 = vmatprep.subr.bf16.mxu0 0
        %762 = vmatpush1.bf16.msra.mxu0 0
        %763 = vmatprep.subr.bf16.mxu0 0
        %764 = vmatpush1.bf16.msra.mxu0 0
        %765 = vmatprep.subr.bf16.mxu0 0
        %766 = vmatpush1.bf16.msra.mxu0 0
        %767 = vmatprep.subr.bf16.mxu0 0
        %768 = vmatpush1.bf16.msra.mxu0 0
        %769 = vmatprep.subr.bf16.mxu0 0
        %770 = vmatpush1.bf16.msra.mxu0 0
        %771 = vmatprep.subr.bf16.mxu0 0
        %772 = vmatpush1.bf16.msra.mxu0 0
        %773 = vmatprep.subr.bf16.mxu0 0
        %774 = vmatpush1.bf16.msra.mxu0 0
        %775 = vmatprep.subr.bf16.mxu0 0
        %776 = vmatpush1.bf16.msra.mxu0 0
        %777 = vmatprep.subr.bf16.mxu0 0
        %778 = vmatpush1.bf16.msra.mxu0 0
        %779 = vmatprep.subr.bf16.mxu0 0
        %780 = vmatpush1.bf16.msra.mxu0 0
        %781 = vmatprep.subr.bf16.mxu0 0
        %782 = vmatpush1.bf16.msra.mxu0 0
        %783 = vmatprep.subr.bf16.mxu0 0
        %784 = vmatpush1.bf16.msra.mxu0 0
        %785 = vmatprep.mubr.bf16.mxu0 0
        %786 = vmatmul.mubr.bf16.gmra.mrb[0].mxu0 %v751
        %v787 = vpop.f32.mrb[0].mxu0
        %v788 = vadd.f32 0.0, %v787
        %v789 = vpop.f32.mrb[0].mxu0
        %v790 = vpop.f32.mrb[0].mxu0
        %v791 = vadd.f32 0.0, %v790
        %v792 = vpop.f32.mrb[0].mxu0
        %793 = vdwg.mxu0
        %v795 = vsel %vm661, %v565, 0
        %797 = vmatprep.subr.bf16.mxu0 0
        %798 = vmatpush1.bf16.msra.mxu0 %v653
        %799 = vmatprep.subr.bf16.mxu0 0
        %800 = vmatpush1.bf16.msra.mxu0 0
        %801 = vmatprep.subr.bf16.mxu0 0
        %802 = vmatpush1.bf16.msra.mxu0 0
        %803 = vmatprep.subr.bf16.mxu0 0
        %804 = vmatpush1.bf16.msra.mxu0 0
        %805 = vmatprep.subr.bf16.mxu0 0
        %806 = vmatpush1.bf16.msra.mxu0 0
        %807 = vmatprep.subr.bf16.mxu0 0
        %808 = vmatpush1.bf16.msra.mxu0 0
        %809 = vmatprep.subr.bf16.mxu0 0
        %810 = vmatpush1.bf16.msra.mxu0 0
        %811 = vmatprep.subr.bf16.mxu0 0
        %812 = vmatpush1.bf16.msra.mxu0 0
        %813 = vmatprep.subr.bf16.mxu0 0
        %814 = vmatpush1.bf16.msra.mxu0 0
        %815 = vmatprep.subr.bf16.mxu0 0
        %816 = vmatpush1.bf16.msra.mxu0 0
        %817 = vmatprep.subr.bf16.mxu0 0
        %818 = vmatpush1.bf16.msra.mxu0 0
        %819 = vmatprep.subr.bf16.mxu0 0
        %820 = vmatpush1.bf16.msra.mxu0 0
        %821 = vmatprep.subr.bf16.mxu0 0
        %822 = vmatpush1.bf16.msra.mxu0 0
        %823 = vmatprep.subr.bf16.mxu0 0
        %824 = vmatpush1.bf16.msra.mxu0 0
        %825 = vmatprep.subr.bf16.mxu0 0
        %826 = vmatpush1.bf16.msra.mxu0 0
        %827 = vmatprep.subr.bf16.mxu0 0
        %828 = vmatpush1.bf16.msra.mxu0 0
        %829 = vmatprep.mubr.bf16.mxu0 0
        %830 = vmatmul.mubr.bf16.gmra.mrb[0].mxu0 %v795
        %v831 = vpop.f32.mrb[0].mxu0
        %v832 = vadd.f32 0.0, %v831
        %v833 = vpop.f32.mrb[0].mxu0
        %v834 = vpop.f32.mrb[0].mxu0
        %v835 = vadd.f32 0.0, %v834
        %v836 = vpop.f32.mrb[0].mxu0
        %837 = vdwg.mxu0
        %v838 = vsel %vm661, %v700, -inf
        %839 = vmax.xlane.f32.xlu0 %v838
        %v840 = vpop.xlane.xlu0 %839
        %v841 = vsel %vm661, %v703, -inf
        %842 = vmax.xlane.f32.xlu0 %v841
        %v843 = vpop.xlane.xlu0 %842
        %v844 = vsel %vm661, %v744, -inf
        %845 = vmax.xlane.f32.xlu0 %v844
        %v846 = vpop.xlane.xlu0 %845
        %v847 = vsel %vm661, %v747, -inf
        %848 = vmax.xlane.f32.xlu0 %v847
        %v849 = vpop.xlane.xlu0 %848
        %v850 = vsel %vm661, %v788, -inf
        %851 = vmax.xlane.f32.xlu0 %v850
        %v852 = vpop.xlane.xlu0 %851
        %v853 = vsel %vm661, %v791, -inf
        %854 = vmax.xlane.f32.xlu0 %v853
        %v855 = vpop.xlane.xlu0 %854
        %v856 = vsel %vm661, %v832, -inf
        %857 = vmax.xlane.f32.xlu0 %v856
        %v858 = vpop.xlane.xlu0 %857
        %v859 = vsel %vm661, %v835, -inf
        %860 = vmax.xlane.f32.xlu0 %v859
        %v861 = vpop.xlane.xlu0 %860
        %v862 = vsub.f32 %v700, %v840
        %v863 = vsub.f32 %v703, %v843
        %v864 = vsub.f32 %v744, %v846
        %v865 = vsub.f32 %v747, %v849
        %v866 = vsub.f32 %v788, %v852
        %v867 = vsub.f32 %v791, %v855
        %v868 = vsub.f32 %v832, %v858
        %v869 = vsub.f32 %v835, %v861
        %v870 = vmul.f32 %v862, 1.442695
        %v871 = vpow.pop %v870
        %v872 = vmul.f32 %v863, 1.442695
        %v873 = vpow.pop %v872
        %v874 = vmul.f32 %v864, 1.442695
        %v875 = vpow.pop %v874
        %v876 = vmul.f32 %v865, 1.442695
        %v877 = vpow.pop %v876
        %v878 = vmul.f32 %v866, 1.442695
        %v879 = vpow.pop %v878
        %v880 = vmul.f32 %v867, 1.442695
        %v881 = vpow.pop %v880
        %v882 = vmul.f32 %v868, 1.442695
        %v883 = vpow.pop %v882
        %v884 = vmul.f32 %v869, 1.442695
        %v885 = vpow.pop %v884
        %v886 = vsel %vm661, %v871, 0.0
        %887 = vadd.xlane.f32.xlu0 %v886
        %v888 = vpop.xlane.xlu0 %887
        %v889 = vsel %vm661, %v873, 0.0
        %890 = vadd.xlane.f32.xlu0 %v889
        %v891 = vpop.xlane.xlu0 %890
        %v892 = vsel %vm661, %v875, 0.0
        %893 = vadd.xlane.f32.xlu0 %v892
        %v894 = vpop.xlane.xlu0 %893
        %v895 = vsel %vm661, %v877, 0.0
        %896 = vadd.xlane.f32.xlu0 %v895
        %v897 = vpop.xlane.xlu0 %896
        %v898 = vsel %vm661, %v879, 0.0
        %899 = vadd.xlane.f32.xlu0 %v898
        %v900 = vpop.xlane.xlu0 %899
        %v901 = vsel %vm661, %v881, 0.0
        %902 = vadd.xlane.f32.xlu0 %v901
        %v903 = vpop.xlane.xlu0 %902
        %v904 = vsel %vm661, %v883, 0.0
        %905 = vadd.xlane.f32.xlu0 %v904
        %v906 = vpop.xlane.xlu0 %905
        %v907 = vsel %vm661, %v885, 0.0
        %908 = vadd.xlane.f32.xlu0 %v907
        %v909 = vpop.xlane.xlu0 %908
        %v910 = vpack.c.bf16 %v873, %v871
        %v911 = vpack.c.bf16 %v877, %v875
        %v912 = vpack.c.bf16 %v881, %v879
        %v913 = vpack.c.bf16 %v885, %v883
        %v915 = vsel %vm661, %v910, 0
        %917 = vmatprep.subr.bf16.mxu0 0
        %918 = vmatpush1.bf16.msra.mxu0 %v574
        %919 = vmatprep.subr.bf16.mxu0 0
        %920 = vmatpush1.bf16.msra.mxu0 0
        %921 = vmatprep.subr.bf16.mxu0 0
        %922 = vmatpush1.bf16.msra.mxu0 0
        %923 = vmatprep.subr.bf16.mxu0 0
        %924 = vmatpush1.bf16.msra.mxu0 0
        %925 = vmatprep.subr.bf16.mxu0 0
        %926 = vmatpush1.bf16.msra.mxu0 0
        %927 = vmatprep.subr.bf16.mxu0 0
        %928 = vmatpush1.bf16.msra.mxu0 0
        %929 = vmatprep.subr.bf16.mxu0 0
        %930 = vmatpush1.bf16.msra.mxu0 0
        %931 = vmatprep.subr.bf16.mxu0 0
        %932 = vmatpush1.bf16.msra.mxu0 0
        %933 = vmatprep.subr.bf16.mxu0 0
        %934 = vmatpush1.bf16.msra.mxu0 0
        %935 = vmatprep.subr.bf16.mxu0 0
        %936 = vmatpush1.bf16.msra.mxu0 0
        %937 = vmatprep.subr.bf16.mxu0 0
        %938 = vmatpush1.bf16.msra.mxu0 0
        %939 = vmatprep.subr.bf16.mxu0 0
        %940 = vmatpush1.bf16.msra.mxu0 0
        %941 = vmatprep.subr.bf16.mxu0 0
        %942 = vmatpush1.bf16.msra.mxu0 0
        %943 = vmatprep.subr.bf16.mxu0 0
        %944 = vmatpush1.bf16.msra.mxu0 0
        %945 = vmatprep.subr.bf16.mxu0 0
        %946 = vmatpush1.bf16.msra.mxu0 0
        %947 = vmatprep.subr.bf16.mxu0 0
        %948 = vmatpush1.bf16.msra.mxu0 0
        %949 = vmatprep.mubr.bf16.mxu0 0
        %950 = vmatmul.mubr.bf16.gmra.mrb[0].mxu0 %v915
        %v951 = vpop.f32.mrb[0].mxu0
        %v952 = vadd.f32 0.0, %v951
        %v953 = vpop.f32.mrb[0].mxu0
        %v954 = vpop.f32.mrb[0].mxu0
        %v955 = vadd.f32 0.0, %v954
        %v956 = vpop.f32.mrb[0].mxu0
        %957 = vdwg.mxu0
        %v959 = vsel %vm661, %v911, 0
        %961 = vmatprep.subr.bf16.mxu0 0
        %962 = vmatpush1.bf16.msra.mxu0 %v577
        %963 = vmatprep.subr.bf16.mxu0 0
        %964 = vmatpush1.bf16.msra.mxu0 0
        %965 = vmatprep.subr.bf16.mxu0 0
        %966 = vmatpush1.bf16.msra.mxu0 0
        %967 = vmatprep.subr.bf16.mxu0 0
        %968 = vmatpush1.bf16.msra.mxu0 0
        %969 = vmatprep.subr.bf16.mxu0 0
        %970 = vmatpush1.bf16.msra.mxu0 0
        %971 = vmatprep.subr.bf16.mxu0 0
        %972 = vmatpush1.bf16.msra.mxu0 0
        %973 = vmatprep.subr.bf16.mxu0 0
        %974 = vmatpush1.bf16.msra.mxu0 0
        %975 = vmatprep.subr.bf16.mxu0 0
        %976 = vmatpush1.bf16.msra.mxu0 0
        %977 = vmatprep.subr.bf16.mxu0 0
        %978 = vmatpush1.bf16.msra.mxu0 0
        %979 = vmatprep.subr.bf16.mxu0 0
        %980 = vmatpush1.bf16.msra.mxu0 0
        %981 = vmatprep.subr.bf16.mxu0 0
        %982 = vmatpush1.bf16.msra.mxu0 0
        %983 = vmatprep.subr.bf16.mxu0 0
        %984 = vmatpush1.bf16.msra.mxu0 0
        %985 = vmatprep.subr.bf16.mxu0 0
        %986 = vmatpush1.bf16.msra.mxu0 0
        %987 = vmatprep.subr.bf16.mxu0 0
        %988 = vmatpush1.bf16.msra.mxu0 0
        %989 = vmatprep.subr.bf16.mxu0 0
        %990 = vmatpush1.bf16.msra.mxu0 0
        %991 = vmatprep.subr.bf16.mxu0 0
        %992 = vmatpush1.bf16.msra.mxu0 0
        %993 = vmatprep.mubr.bf16.mxu0 0
        %994 = vmatmul.mubr.bf16.gmra.mrb[0].mxu0 %v959
        %v995 = vpop.f32.mrb[0].mxu0
        %v996 = vadd.f32 0.0, %v995
        %v997 = vpop.f32.mrb[0].mxu0
        %v998 = vpop.f32.mrb[0].mxu0
        %v999 = vadd.f32 0.0, %v998
        %v1000 = vpop.f32.mrb[0].mxu0
        %1001 = vdwg.mxu0
        %v1003 = vsel %vm661, %v912, 0
        %1005 = vmatprep.subr.bf16.mxu0 0
        %1006 = vmatpush1.bf16.msra.mxu0 %v580
        %1007 = vmatprep.subr.bf16.mxu0 0
        %1008 = vmatpush1.bf16.msra.mxu0 0
        %1009 = vmatprep.subr.bf16.mxu0 0
        %1010 = vmatpush1.bf16.msra.mxu0 0
        %1011 = vmatprep.subr.bf16.mxu0 0
        %1012 = vmatpush1.bf16.msra.mxu0 0
        %1013 = vmatprep.subr.bf16.mxu0 0
        %1014 = vmatpush1.bf16.msra.mxu0 0
        %1015 = vmatprep.subr.bf16.mxu0 0
        %1016 = vmatpush1.bf16.msra.mxu0 0
        %1017 = vmatprep.subr.bf16.mxu0 0
        %1018 = vmatpush1.bf16.msra.mxu0 0
        %1019 = vmatprep.subr.bf16.mxu0 0
        %1020 = vmatpush1.bf16.msra.mxu0 0
        %1021 = vmatprep.subr.bf16.mxu0 0
        %1022 = vmatpush1.bf16.msra.mxu0 0
        %1023 = vmatprep.subr.bf16.mxu0 0
        %1024 = vmatpush1.bf16.msra.mxu0 0
        %1025 = vmatprep.subr.bf16.mxu0 0
        %1026 = vmatpush1.bf16.msra.mxu0 0
        %1027 = vmatprep.subr.bf16.mxu0 0
        %1028 = vmatpush1.bf16.msra.mxu0 0
        %1029 = vmatprep.subr.bf16.mxu0 0
        %1030 = vmatpush1.bf16.msra.mxu0 0
        %1031 = vmatprep.subr.bf16.mxu0 0
        %1032 = vmatpush1.bf16.msra.mxu0 0
        %1033 = vmatprep.subr.bf16.mxu0 0
        %1034 = vmatpush1.bf16.msra.mxu0 0
        %1035 = vmatprep.subr.bf16.mxu0 0
        %1036 = vmatpush1.bf16.msra.mxu0 0
        %1037 = vmatprep.mubr.bf16.mxu0 0
        %1038 = vmatmul.mubr.bf16.gmra.mrb[0].mxu0 %v1003
        %v1039 = vpop.f32.mrb[0].mxu0
        %v1040 = vadd.f32 0.0, %v1039
        %v1041 = vpop.f32.mrb[0].mxu0
        %v1042 = vpop.f32.mrb[0].mxu0
        %v1043 = vadd.f32 0.0, %v1042
        %v1044 = vpop.f32.mrb[0].mxu0
        %1045 = vdwg.mxu0
        %v1047 = vsel %vm661, %v913, 0
        %1049 = vmatprep.subr.bf16.mxu0 0
        %1050 = vmatpush1.bf16.msra.mxu0 %v583
        %1051 = vmatprep.subr.bf16.mxu0 0
        %1052 = vmatpush1.bf16.msra.mxu0 0
        %1053 = vmatprep.subr.bf16.mxu0 0
        %1054 = vmatpush1.bf16.msra.mxu0 0
        %1055 = vmatprep.subr.bf16.mxu0 0
        %1056 = vmatpush1.bf16.msra.mxu0 0
        %1057 = vmatprep.subr.bf16.mxu0 0
        %1058 = vmatpush1.bf16.msra.mxu0 0
        %1059 = vmatprep.subr.bf16.mxu0 0
        %1060 = vmatpush1.bf16.msra.mxu0 0
        %1061 = vmatprep.subr.bf16.mxu0 0
        %1062 = vmatpush1.bf16.msra.mxu0 0
        %1063 = vmatprep.subr.bf16.mxu0 0
        %1064 = vmatpush1.bf16.msra.mxu0 0
        %1065 = vmatprep.subr.bf16.mxu0 0
        %1066 = vmatpush1.bf16.msra.mxu0 0
        %1067 = vmatprep.subr.bf16.mxu0 0
        %1068 = vmatpush1.bf16.msra.mxu0 0
        %1069 = vmatprep.subr.bf16.mxu0 0
        %1070 = vmatpush1.bf16.msra.mxu0 0
        %1071 = vmatprep.subr.bf16.mxu0 0
        %1072 = vmatpush1.bf16.msra.mxu0 0
        %1073 = vmatprep.subr.bf16.mxu0 0
        %1074 = vmatpush1.bf16.msra.mxu0 0
        %1075 = vmatprep.subr.bf16.mxu0 0
        %1076 = vmatpush1.bf16.msra.mxu0 0
        %1077 = vmatprep.subr.bf16.mxu0 0
        %1078 = vmatpush1.bf16.msra.mxu0 0
        %1079 = vmatprep.subr.bf16.mxu0 0
        %1080 = vmatpush1.bf16.msra.mxu0 0
        %1081 = vmatprep.mubr.bf16.mxu0 0
        %1082 = vmatmul.mubr.bf16.gmra.mrb[0].mxu0 %v1047
        %v1083 = vpop.f32.mrb[0].mxu0
        %v1084 = vadd.f32 0.0, %v1083
        %v1085 = vpop.f32.mrb[0].mxu0
        %v1086 = vpop.f32.mrb[0].mxu0
        %v1087 = vadd.f32 0.0, %v1086
        %v1088 = vpop.f32.mrb[0].mxu0
        %1089 = vdwg.mxu0
        %v1090 = vrcp.pop %v888
        %v1091 = vrcp.pop %v891
        %v1092 = vrcp.pop %v894
        %v1093 = vrcp.pop %v897
        %v1094 = vrcp.pop %v900
        %v1095 = vrcp.pop %v903
        %v1096 = vrcp.pop %v906
        %v1097 = vrcp.pop %v909
        %v1098 = vmul.f32 %v952, %v1090
        %v1099 = vmul.f32 %v955, %v1091
        %v1100 = vmul.f32 %v996, %v1092
        %v1101 = vmul.f32 %v999, %v1093
        %v1102 = vmul.f32 %v1040, %v1094
        %v1103 = vmul.f32 %v1043, %v1095
        %v1104 = vmul.f32 %v1084, %v1096
        %v1105 = vmul.f32 %v1087, %v1097
        %v1106 = vpack.c.bf16 %v1099, %v1098
        %v1107 = vpack.c.bf16 %v1101, %v1100
        %v1108 = vpack.c.bf16 %v1103, %v1102
        %v1109 = vpack.c.bf16 %v1105, %v1104
        %v1112 = vpack.i.b16 %v1107, %v1106
        %v1114 = vshrl.u32 %v1106, 16
        %v1115 = vshrl.u32 %v1107, 16
        %v1116 = vpack.i.b16 %v1115, %v1114
        %v1120 = vpack.i.b16 %v1109, %v1108
        %v1122 = vshrl.u32 %v1108, 16
        %v1123 = vshrl.u32 %v1109, 16
        %v1124 = vpack.i.b16 %v1123, %v1122
        %v1127 = vpack.i.b16 0, 0
        %v1129 = vshrl.u32 0, 16
        %v1130 = vpack.i.b16 %v1129, %v1129
        %v1132 = vcombine.high %v1112, %v1127
        %v1134 = vunpack.c.l.s4 1983009808
        %v1135 = vunpack.c.0.s8 %v1134
        %v1136 = vlaneseq
        %v1137 = vshrl.u32 %v1136, 7
        %v1138 = vsub.s32 %v1135, %v1137
        %v1139 = vrot.slane %v1112, %v1138
        %v1141 = vunpack.c.l.s4 1983009808
        %v1142 = vunpack.c.0.s8 %v1141
        %v1143 = vlaneseq
        %v1144 = vshrl.u32 %v1143, 7
        %v1145 = vsub.s32 %v1142, %v1144
        %v1146 = vrot.slane %v1132, %v1145
        %v1147 = vcombine.high %v1120, %v1127
        %v1149 = vunpack.c.l.s4 1983009808
        %v1150 = vunpack.c.0.s8 %v1149
        %v1151 = vlaneseq
        %v1152 = vshrl.u32 %v1151, 7
        %v1153 = vsub.s32 %v1150, %v1152
        %v1154 = vrot.slane %v1120, %v1153
        %v1156 = vunpack.c.l.s4 1983009808
        %v1157 = vunpack.c.0.s8 %v1156
        %v1158 = vlaneseq
        %v1159 = vshrl.u32 %v1158, 7
        %v1160 = vsub.s32 %v1157, %v1159
        %v1161 = vrot.slane %v1147, %v1160
        %v1162 = vcombine.low %v1139, %v1154
        %v1163 = vcombine.high %v1139, %v1154
        %v1165 = vunpack.c.l.s4 1934713408
        %v1166 = vunpack.c.0.s8 %v1165
        %v1167 = vlaneseq
        %v1168 = vshrl.u32 %v1167, 7
        %v1169 = vsub.s32 %v1166, %v1168
        %v1170 = vrot.slane %v1162, %v1169
        %v1172 = vunpack.c.l.s4 1934713408
        %v1173 = vunpack.c.0.s8 %v1172
        %v1174 = vlaneseq
        %v1175 = vshrl.u32 %v1174, 7
        %v1176 = vsub.s32 %v1173, %v1175
        %v1177 = vrot.slane %v1163, %v1176
        %v1178 = vcombine.low %v1146, %v1161
        %v1179 = vcombine.high %v1146, %v1161
        %v1181 = vunpack.c.l.s4 1934713408
        %v1182 = vunpack.c.0.s8 %v1181
        %v1183 = vlaneseq
        %v1184 = vshrl.u32 %v1183, 7
        %v1185 = vsub.s32 %v1182, %v1184
        %v1186 = vrot.slane %v1178, %v1185
        %v1188 = vunpack.c.l.s4 1934713408
        %v1189 = vunpack.c.0.s8 %v1188
        %v1190 = vlaneseq
        %v1191 = vshrl.u32 %v1190, 7
        %v1192 = vsub.s32 %v1189, %v1191
        %v1193 = vrot.slane %v1179, %v1192
        %v1194 = vcombine.high %v1170, 0
        %v1195 = vcombine.high %v1177, 0
        %v1196 = vcombine.high %v1186, 0
        %v1197 = vcombine.high %v1193, 0
        %v1198 = vcombine.high %v1116, %v1130
        %v1200 = vunpack.c.l.s4 1983009808
        %v1201 = vunpack.c.0.s8 %v1200
        %v1202 = vlaneseq
        %v1203 = vshrl.u32 %v1202, 7
        %v1204 = vsub.s32 %v1201, %v1203
        %v1205 = vrot.slane %v1116, %v1204
        %v1207 = vunpack.c.l.s4 1983009808
        %v1208 = vunpack.c.0.s8 %v1207
        %v1209 = vlaneseq
        %v1210 = vshrl.u32 %v1209, 7
        %v1211 = vsub.s32 %v1208, %v1210
        %v1212 = vrot.slane %v1198, %v1211
        %v1213 = vcombine.high %v1124, %v1130
        %v1215 = vunpack.c.l.s4 1983009808
        %v1216 = vunpack.c.0.s8 %v1215
        %v1217 = vlaneseq
        %v1218 = vshrl.u32 %v1217, 7
        %v1219 = vsub.s32 %v1216, %v1218
        %v1220 = vrot.slane %v1124, %v1219
        %v1222 = vunpack.c.l.s4 1983009808
        %v1223 = vunpack.c.0.s8 %v1222
        %v1224 = vlaneseq
        %v1225 = vshrl.u32 %v1224, 7
        %v1226 = vsub.s32 %v1223, %v1225
        %v1227 = vrot.slane %v1213, %v1226
        %v1228 = vcombine.low %v1205, %v1220
        %v1229 = vcombine.high %v1205, %v1220
        %v1231 = vunpack.c.l.s4 1934713408
        %v1232 = vunpack.c.0.s8 %v1231
        %v1233 = vlaneseq
        %v1234 = vshrl.u32 %v1233, 7
        %v1235 = vsub.s32 %v1232, %v1234
        %v1236 = vrot.slane %v1228, %v1235
        %v1238 = vunpack.c.l.s4 1934713408
        %v1239 = vunpack.c.0.s8 %v1238
        %v1240 = vlaneseq
        %v1241 = vshrl.u32 %v1240, 7
        %v1242 = vsub.s32 %v1239, %v1241
        %v1243 = vrot.slane %v1229, %v1242
        %v1244 = vcombine.low %v1212, %v1227
        %v1245 = vcombine.high %v1212, %v1227
        %v1247 = vunpack.c.l.s4 1934713408
        %v1248 = vunpack.c.0.s8 %v1247
        %v1249 = vlaneseq
        %v1250 = vshrl.u32 %v1249, 7
        %v1251 = vsub.s32 %v1248, %v1250
        %v1252 = vrot.slane %v1244, %v1251
        %v1254 = vunpack.c.l.s4 1934713408
        %v1255 = vunpack.c.0.s8 %v1254
        %v1256 = vlaneseq
        %v1257 = vshrl.u32 %v1256, 7
        %v1258 = vsub.s32 %v1255, %v1257
        %v1259 = vrot.slane %v1245, %v1258
        %v1260 = vcombine.high %v1236, 0
        %v1261 = vcombine.high %v1243, 0
        %v1262 = vcombine.high %v1252, 0
        %v1263 = vcombine.high %v1259, 0
        %v1264 = vcombine.low %v1170, %v1177
        %v1266 = vunpack.c.l.s4 1983009808
        %v1267 = vunpack.c.0.s8 %v1266
        %v1268 = vlaneseq
        %v1269 = vshrl.u32 %v1268, 7
        %v1270 = vsub.s32 %v1267, %v1269
        %v1271 = vrot.slane %v1264, %v1270
        %v1272 = vcombine.low %v1194, %v1195
        %v1274 = vunpack.c.l.s4 1983009808
        %v1275 = vunpack.c.0.s8 %v1274
        %v1276 = vlaneseq
        %v1277 = vshrl.u32 %v1276, 7
        %v1278 = vsub.s32 %v1275, %v1277
        %v1279 = vrot.slane %v1272, %v1278
        %v1280 = vcombine.low %v1186, %v1193
        %v1282 = vunpack.c.l.s4 1983009808
        %v1283 = vunpack.c.0.s8 %v1282
        %v1284 = vlaneseq
        %v1285 = vshrl.u32 %v1284, 7
        %v1286 = vsub.s32 %v1283, %v1285
        %v1287 = vrot.slane %v1280, %v1286
        %v1288 = vcombine.low %v1196, %v1197
        %v1290 = vunpack.c.l.s4 1983009808
        %v1291 = vunpack.c.0.s8 %v1290
        %v1292 = vlaneseq
        %v1293 = vshrl.u32 %v1292, 7
        %v1294 = vsub.s32 %v1291, %v1293
        %v1295 = vrot.slane %v1288, %v1294
        %v1296 = vcombine.low %v1271, %v1279
        %v1298 = vunpack.c.l.s4 1934713408
        %v1299 = vunpack.c.0.s8 %v1298
        %v1300 = vlaneseq
        %v1301 = vshrl.u32 %v1300, 7
        %v1302 = vsub.s32 %v1299, %v1301
        %v1303 = vrot.slane %v1296, %v1302
        %v1304 = vcombine.low %v1287, %v1295
        %v1306 = vunpack.c.l.s4 1934713408
        %v1307 = vunpack.c.0.s8 %v1306
        %v1308 = vlaneseq
        %v1309 = vshrl.u32 %v1308, 7
        %v1310 = vsub.s32 %v1307, %v1309
        %v1311 = vrot.slane %v1304, %v1310
        %v1312 = vcombine.low %v1303, %v1311
        %v1313 = vcombine.high %v1303, %v1311
        %v1314 = vcombine.low %v1236, %v1243
        %v1316 = vunpack.c.l.s4 1983009808
        %v1317 = vunpack.c.0.s8 %v1316
        %v1318 = vlaneseq
        %v1319 = vshrl.u32 %v1318, 7
        %v1320 = vsub.s32 %v1317, %v1319
        %v1321 = vrot.slane %v1314, %v1320
        %v1322 = vcombine.low %v1260, %v1261
        %v1324 = vunpack.c.l.s4 1983009808
        %v1325 = vunpack.c.0.s8 %v1324
        %v1326 = vlaneseq
        %v1327 = vshrl.u32 %v1326, 7
        %v1328 = vsub.s32 %v1325, %v1327
        %v1329 = vrot.slane %v1322, %v1328
        %v1330 = vcombine.low %v1252, %v1259
        %v1332 = vunpack.c.l.s4 1983009808
        %v1333 = vunpack.c.0.s8 %v1332
        %v1334 = vlaneseq
        %v1335 = vshrl.u32 %v1334, 7
        %v1336 = vsub.s32 %v1333, %v1335
        %v1337 = vrot.slane %v1330, %v1336
        %v1338 = vcombine.low %v1262, %v1263
        %v1340 = vunpack.c.l.s4 1983009808
        %v1341 = vunpack.c.0.s8 %v1340
        %v1342 = vlaneseq
        %v1343 = vshrl.u32 %v1342, 7
        %v1344 = vsub.s32 %v1341, %v1343
        %v1345 = vrot.slane %v1338, %v1344
        %v1346 = vcombine.low %v1321, %v1329
        %v1348 = vunpack.c.l.s4 1934713408
        %v1349 = vunpack.c.0.s8 %v1348
        %v1350 = vlaneseq
        %v1351 = vshrl.u32 %v1350, 7
        %v1352 = vsub.s32 %v1349, %v1351
        %v1353 = vrot.slane %v1346, %v1352
        %v1354 = vcombine.low %v1337, %v1345
        %v1356 = vunpack.c.l.s4 1934713408
        %v1357 = vunpack.c.0.s8 %v1356
        %v1358 = vlaneseq
        %v1359 = vshrl.u32 %v1358, 7
        %v1360 = vsub.s32 %v1357, %v1359
        %v1361 = vrot.slane %v1354, %v1360
        %v1362 = vcombine.low %v1353, %v1361
        %v1363 = vcombine.high %v1353, %v1361
        %v1366 = vpack.i.b16 %v1362, %v1312
        %v1367 = vshrl.u32 %v1312, 16
        %v1368 = vshrl.u32 %v1362, 16
        %v1369 = vpack.i.b16 %v1368, %v1367
        %v1372 = vpack.i.b16 %v1363, %v1313
        %v1373 = vshrl.u32 %v1313, 16
        %v1374 = vshrl.u32 %v1363, 16
        %v1375 = vpack.i.b16 %v1374, %v1373
        %1376 = vrot.lane.b32.xlu0 %v1369, 16
        %v1377 = vpop.permute.xlu0 %1376
        %1378 = vrot.lane.b32.xlu0 %v1372, 32
        %v1379 = vpop.permute.xlu0 %1378
        %1380 = vrot.lane.b32.xlu0 %v1375, 48
        %v1381 = vpop.permute.xlu0 %1380
        %v1384 = vsel %vm661, %v1366, %v1377
        %vm1385 = vcmask 261120
        %v1387 = vsel %vm1385, %v1384, %v1379
        %vm1388 = vcmask 392192
        %v1390 = vsel %vm1388, %v1387, %v1381
        %v1391 = vld [vmem:[%s4] sm:$0xf]
        %v1392 = vld [vmem:[%s4 + $0x4] sm:$0xf]
        %v1393 = vld [vmem:[%s4 + $0x8] sm:$0xf]
        %v1394 = vld [vmem:[%s4 + $0xc] sm:$0xf]
        %v1395 = vld [vmem:[%s4 + $0x10] sm:$0xf]
        %v1396 = vld [vmem:[%s4 + $0x14] sm:$0xf]
        %v1397 = vld [vmem:[%s4 + $0x18] sm:$0xf]
        %v1398 = vld [vmem:[%s4 + $0x1c] sm:$0xf]
        %v1399 = vld [vmem:[%s5] sm:$0x1]
        %v1401 = vlaneseq
        %v1402 = vshrl.u32 %v1401, 7
        %v1403 = vsub.s32 0, %v1402
        %v1404 = vrot.slane %v1399, %v1403
        %v1414 = vunpack.c.l.b16 %v1391
        %v1415 = vunpack.c.l.b16 %v1392
        %v1416 = vunpack.c.l.b16 %v1393
        %v1417 = vunpack.c.l.b16 %v1394
        %v1418 = vunpack.c.l.b16 %v1395
        %v1419 = vunpack.c.l.b16 %v1396
        %v1420 = vunpack.c.l.b16 %v1397
        %v1421 = vunpack.c.l.b16 %v1398
        %v1422 = vpack.c.b16 %v1415, %v1414
        %v1423 = vpack.c.b16 %v1417, %v1416
        %v1424 = vpack.c.b16 %v1419, %v1418
        %v1425 = vpack.c.b16 %v1421, %v1420
        %v1430 = vsel %vm415, %v1390, 0
        %1432 = vmatprep.subr.bf16.mxu0 0
        %1433 = vmatpush1.bf16.msra.mxu0 %v1422
        %1434 = vmatprep.subr.bf16.mxu0 0
        %1435 = vmatpush1.bf16.msra.mxu0 %v1423
        %1436 = vmatprep.subr.bf16.mxu0 0
        %1437 = vmatpush1.bf16.msra.mxu0 %v1424
        %1438 = vmatprep.subr.bf16.mxu0 0
        %1439 = vmatpush1.bf16.msra.mxu0 %v1425
        %1440 = vmatprep.subr.bf16.mxu0 0
        %1441 = vmatpush1.bf16.msra.mxu0 0
        %1442 = vmatprep.subr.bf16.mxu0 0
        %1443 = vmatpush1.bf16.msra.mxu0 0
        %1444 = vmatprep.subr.bf16.mxu0 0
        %1445 = vmatpush1.bf16.msra.mxu0 0
        %1446 = vmatprep.subr.bf16.mxu0 0
        %1447 = vmatpush1.bf16.msra.mxu0 0
        %1448 = vmatprep.subr.bf16.mxu0 0
        %1449 = vmatpush1.bf16.msra.mxu0 0
        %1450 = vmatprep.subr.bf16.mxu0 0
        %1451 = vmatpush1.bf16.msra.mxu0 0
        %1452 = vmatprep.subr.bf16.mxu0 0
        %1453 = vmatpush1.bf16.msra.mxu0 0
        %1454 = vmatprep.subr.bf16.mxu0 0
        %1455 = vmatpush1.bf16.msra.mxu0 0
        %1456 = vmatprep.subr.bf16.mxu0 0
        %1457 = vmatpush1.bf16.msra.mxu0 0
        %1458 = vmatprep.subr.bf16.mxu0 0
        %1459 = vmatpush1.bf16.msra.mxu0 0
        %1460 = vmatprep.subr.bf16.mxu0 0
        %1461 = vmatpush1.bf16.msra.mxu0 0
        %1462 = vmatprep.subr.bf16.mxu0 0
        %1463 = vmatpush1.bf16.msra.mxu0 0
        %1464 = vmatprep.mubr.bf16.mxu0 0
        %1465 = vmatmul.mubr.bf16.gmra.mrb[0].mxu0 %v1430
        %v1466 = vpop.f32.mrb[0].mxu0
        %v1467 = vadd.f32 %v1404, %v1466
        %v1468 = vpop.f32.mrb[0].mxu0
        %v1469 = vpop.f32.mrb[0].mxu0
        %v1470 = vadd.f32 %v1404, %v1469
        %v1471 = vpop.f32.mrb[0].mxu0
        %1472 = vdwg.mxu0
        %v1473 = vadd.f32 %v413, %v1467
        %v1474 = vadd.f32 %v414, %v1470
        %v1475 = vsel %vm415, %v1473, 0.0
        %1476 = vadd.xlane.f32.xlu0 %v1475
        %v1477 = vpop.xlane.xlu0 %1476
        %v1478 = vsel %vm415, %v1474, 0.0
        %1479 = vadd.xlane.f32.xlu0 %v1478
        %v1480 = vpop.xlane.xlu0 %1479
        %v1481 = vmul.f32 %v1477, %v422
        %v1482 = vmul.f32 %v1480, %v422
        %v1483 = vsub.f32 %v1473, %v1481
        %v1484 = vsub.f32 %v1474, %v1482
        %v1485 = vmul.f32 %v1483, %v1483
        %v1486 = vmul.f32 %v1484, %v1484
        %v1487 = vsel %vm415, %v1485, 0.0
        %1488 = vadd.xlane.f32.xlu0 %v1487
        %v1489 = vpop.xlane.xlu0 %1488
        %v1490 = vsel %vm415, %v1486, 0.0
        %1491 = vadd.xlane.f32.xlu0 %v1490
        %v1492 = vpop.xlane.xlu0 %1491
        %v1493 = vmul.f32 %v1489, %v422
        %v1494 = vmul.f32 %v1492, %v422
        %v1495 = vadd.f32 %v1493, 1e-06
        %v1496 = vadd.f32 %v1494, 1e-06
        %v1497 = vrsqrt.pop %v1495
        %v1498 = vrsqrt.pop %v1496
        %v1499 = vmul.f32 %v1483, %v1497
        %v1500 = vmul.f32 %v1484, %v1498
        %v1501 = vld [vmem:[%s6] sm:$0x1]
        %v1503 = vlaneseq
        %v1504 = vshrl.u32 %v1503, 7
        %v1505 = vsub.s32 0, %v1504
        %v1506 = vrot.slane %v1501, %v1505
        %v1508 = vmul.f32 %v1499, %v1506
        %v1509 = vmul.f32 %v1500, %v1506
        %v1510 = vld [vmem:[%s7] sm:$0x1]
        %v1512 = vlaneseq
        %v1513 = vshrl.u32 %v1512, 7
        %v1514 = vsub.s32 0, %v1513
        %v1515 = vrot.slane %v1510, %v1514
        %v1517 = vadd.f32 %v1508, %v1515
        %v1518 = vadd.f32 %v1509, %v1515
        %v1519 = vpack.c.bf16 %v1518, %v1517
        %v1520 = vld [vmem:[%s8] sm:$0xff]
        %v1521 = vld [vmem:[%s8 + $0x8] sm:$0xff]
        %v1522 = vld [vmem:[%s8 + $0x10] sm:$0xff]
        %v1523 = vld [vmem:[%s8 + $0x18] sm:$0xff]
        %v1524 = vld [vmem:[%s8 + $0x20] sm:$0xff]
        %v1525 = vld [vmem:[%s8 + $0x28] sm:$0xff]
        %v1526 = vld [vmem:[%s8 + $0x30] sm:$0xff]
        %v1527 = vld [vmem:[%s8 + $0x38] sm:$0xff]
        %v1528 = vld [vmem:[%s9] sm:$0x3]
        %v1530 = vlaneseq
        %v1531 = vshrl.u32 %v1530, 7
        %v1532 = vsub.s32 0, %v1531
        %v1533 = vrot.slane %v1528, %v1532
        %v1534 = vlaneseq
        %v1535 = vshrl.u32 %v1534, 7
        %v1536 = vsub.s32 1, %v1535
        %v1537 = vrot.slane %v1528, %v1536
        %v1548 = vunpack.c.l.b16 %v1520
        %v1549 = vunpack.c.h.b16 %v1520
        %v1550 = vunpack.c.l.b16 %v1521
        %v1551 = vunpack.c.h.b16 %v1521
        %v1552 = vunpack.c.l.b16 %v1522
        %v1553 = vunpack.c.h.b16 %v1522
        %v1554 = vunpack.c.l.b16 %v1523
        %v1555 = vunpack.c.h.b16 %v1523
        %v1556 = vunpack.c.l.b16 %v1524
        %v1557 = vunpack.c.h.b16 %v1524
        %v1558 = vunpack.c.l.b16 %v1525
        %v1559 = vunpack.c.h.b16 %v1525
        %v1560 = vunpack.c.l.b16 %v1526
        %v1561 = vunpack.c.h.b16 %v1526
        %v1562 = vunpack.c.l.b16 %v1527
        %v1563 = vunpack.c.h.b16 %v1527
        %v1564 = vpack.c.b16 %v1550, %v1548
        %v1565 = vpack.c.b16 %v1551, %v1549
        %v1566 = vpack.c.b16 %v1554, %v1552
        %v1567 = vpack.c.b16 %v1555, %v1553
        %v1568 = vpack.c.b16 %v1558, %v1556
        %v1569 = vpack.c.b16 %v1559, %v1557
        %v1570 = vpack.c.b16 %v1562, %v1560
        %v1571 = vpack.c.b16 %v1563, %v1561
        %v1581 = vsel %vm415, %v1519, 0
        %1583 = vmatprep.subr.bf16.mxu0 %v1565
        %1584 = vmatpush1.bf16.msra.mxu0 %v1564
        %1585 = vmatprep.subr.bf16.mxu0 %v1567
        %1586 = vmatpush1.bf16.msra.mxu0 %v1566
        %1587 = vmatprep.subr.bf16.mxu0 %v1569
        %1588 = vmatpush1.bf16.msra.mxu0 %v1568
        %1589 = vmatprep.subr.bf16.mxu0 %v1571
        %1590 = vmatpush1.bf16.msra.mxu0 %v1570
        %1591 = vmatprep.subr.bf16.mxu0 0
        %1592 = vmatpush1.bf16.msra.mxu0 0
        %1593 = vmatprep.subr.bf16.mxu0 0
        %1594 = vmatpush1.bf16.msra.mxu0 0
        %1595 = vmatprep.subr.bf16.mxu0 0
        %1596 = vmatpush1.bf16.msra.mxu0 0
        %1597 = vmatprep.subr.bf16.mxu0 0
        %1598 = vmatpush1.bf16.msra.mxu0 0
        %1599 = vmatprep.subr.bf16.mxu0 0
        %1600 = vmatpush1.bf16.msra.mxu0 0
        %1601 = vmatprep.subr.bf16.mxu0 0
        %1602 = vmatpush1.bf16.msra.mxu0 0
        %1603 = vmatprep.subr.bf16.mxu0 0
        %1604 = vmatpush1.bf16.msra.mxu0 0
        %1605 = vmatprep.subr.bf16.mxu0 0
        %1606 = vmatpush1.bf16.msra.mxu0 0
        %1607 = vmatprep.subr.bf16.mxu0 0
        %1608 = vmatpush1.bf16.msra.mxu0 0
        %1609 = vmatprep.subr.bf16.mxu0 0
        %1610 = vmatpush1.bf16.msra.mxu0 0
        %1611 = vmatprep.subr.bf16.mxu0 0
        %1612 = vmatpush1.bf16.msra.mxu0 0
        %1613 = vmatprep.subr.bf16.mxu0 0
        %1614 = vmatpush1.bf16.msra.mxu0 0
        %1615 = vmatprep.mubr.bf16.mxu0 0
        %1616 = vmatmul.mubr.bf16.gmra.mrb[0].mxu0 %v1581
        %v1617 = vpop.f32.mrb[0].mxu0
        %v1618 = vadd.f32 %v1533, %v1617
        %v1619 = vpop.f32.mrb[0].mxu0
        %v1620 = vadd.f32 %v1537, %v1619
        %v1621 = vpop.f32.mrb[0].mxu0
        %v1622 = vadd.f32 %v1533, %v1621
        %v1623 = vpop.f32.mrb[0].mxu0
        %v1624 = vadd.f32 %v1537, %v1623
        %1625 = vdwg.mxu0
        %v1626 = vmul.f32 %v1618, 0.5
        %v1627 = vmul.f32 %v1620, 0.5
        %v1628 = vmul.f32 %v1622, 0.5
        %v1629 = vmul.f32 %v1624, 0.5
        %v1630 = vmul.f32 %v1618, 0.70710677
        %v1631 = vmul.f32 %v1620, 0.70710677
        %v1632 = vmul.f32 %v1622, 0.70710677
        %v1633 = vmul.f32 %v1624, 0.70710677
        %v1634 = verf.f32.pop %v1630
        %v1635 = verf.f32.pop %v1631
        %v1636 = verf.f32.pop %v1632
        %v1637 = verf.f32.pop %v1633
        %v1638 = vadd.f32 %v1634, 1.0
        %v1639 = vadd.f32 %v1635, 1.0
        %v1640 = vadd.f32 %v1636, 1.0
        %v1641 = vadd.f32 %v1637, 1.0
        %v1642 = vmul.f32 %v1626, %v1638
        %v1643 = vmul.f32 %v1627, %v1639
        %v1644 = vmul.f32 %v1628, %v1640
        %v1645 = vmul.f32 %v1629, %v1641
        %v1646 = vpack.c.bf16 %v1644, %v1642
        %v1647 = vpack.c.bf16 %v1645, %v1643
        %v1648 = vld [vmem:[%s10] sm:$0xf]
        %v1649 = vld [vmem:[%s10 + $0x4] sm:$0xf]
        %v1650 = vld [vmem:[%s10 + $0x8] sm:$0xf]
        %v1651 = vld [vmem:[%s10 + $0xc] sm:$0xf]
        %v1652 = vld [vmem:[%s10 + $0x10] sm:$0xf]
        %v1653 = vld [vmem:[%s10 + $0x14] sm:$0xf]
        %v1654 = vld [vmem:[%s10 + $0x18] sm:$0xf]
        %v1655 = vld [vmem:[%s10 + $0x1c] sm:$0xf]
        %v1656 = vld [vmem:[%s10 + $0x20] sm:$0xf]
        %v1657 = vld [vmem:[%s10 + $0x24] sm:$0xf]
        %v1658 = vld [vmem:[%s10 + $0x28] sm:$0xf]
        %v1659 = vld [vmem:[%s10 + $0x2c] sm:$0xf]
        %v1660 = vld [vmem:[%s10 + $0x30] sm:$0xf]
        %v1661 = vld [vmem:[%s10 + $0x34] sm:$0xf]
        %v1662 = vld [vmem:[%s10 + $0x38] sm:$0xf]
        %v1663 = vld [vmem:[%s10 + $0x3c] sm:$0xf]
        %v1664 = vld [vmem:[%s10 + $0x40] sm:$0xf]
        %v1665 = vld [vmem:[%s10 + $0x44] sm:$0xf]
        %v1666 = vld [vmem:[%s10 + $0x48] sm:$0xf]
        %v1667 = vld [vmem:[%s10 + $0x4c] sm:$0xf]
        %v1668 = vld [vmem:[%s10 + $0x50] sm:$0xf]
        %v1669 = vld [vmem:[%s10 + $0x54] sm:$0xf]
        %v1670 = vld [vmem:[%s10 + $0x58] sm:$0xf]
        %v1671 = vld [vmem:[%s10 + $0x5c] sm:$0xf]
        %v1672 = vld [vmem:[%s10 + $0x60] sm:$0xf]
        %v1673 = vld [vmem:[%s10 + $0x64] sm:$0xf]
        %v1674 = vld [vmem:[%s10 + $0x68] sm:$0xf]
        %v1675 = vld [vmem:[%s10 + $0x6c] sm:$0xf]
        %v1676 = vld [vmem:[%s10 + $0x70] sm:$0xf]
        %v1677 = vld [vmem:[%s10 + $0x74] sm:$0xf]
        %v1678 = vld [vmem:[%s10 + $0x78] sm:$0xf]
        %v1679 = vld [vmem:[%s10 + $0x7c] sm:$0xf]
        %v1680 = vld [vmem:[%s11] sm:$0x1]
        %v1682 = vlaneseq
        %v1683 = vshrl.u32 %v1682, 7
        %v1684 = vsub.s32 0, %v1683
        %v1685 = vrot.slane %v1680, %v1684
        %v1719 = vunpack.c.l.b16 %v1648
        %v1720 = vunpack.c.l.b16 %v1649
        %v1721 = vunpack.c.l.b16 %v1650
        %v1722 = vunpack.c.l.b16 %v1651
        %v1723 = vunpack.c.l.b16 %v1652
        %v1724 = vunpack.c.l.b16 %v1653
        %v1725 = vunpack.c.l.b16 %v1654
        %v1726 = vunpack.c.l.b16 %v1655
        %v1727 = vunpack.c.l.b16 %v1656
        %v1728 = vunpack.c.l.b16 %v1657
        %v1729 = vunpack.c.l.b16 %v1658
        %v1730 = vunpack.c.l.b16 %v1659
        %v1731 = vunpack.c.l.b16 %v1660
        %v1732 = vunpack.c.l.b16 %v1661
        %v1733 = vunpack.c.l.b16 %v1662
        %v1734 = vunpack.c.l.b16 %v1663
        %v1735 = vunpack.c.l.b16 %v1664
        %v1736 = vunpack.c.l.b16 %v1665
        %v1737 = vunpack.c.l.b16 %v1666
        %v1738 = vunpack.c.l.b16 %v1667
        %v1739 = vunpack.c.l.b16 %v1668
        %v1740 = vunpack.c.l.b16 %v1669
        %v1741 = vunpack.c.l.b16 %v1670
        %v1742 = vunpack.c.l.b16 %v1671
        %v1743 = vunpack.c.l.b16 %v1672
        %v1744 = vunpack.c.l.b16 %v1673
        %v1745 = vunpack.c.l.b16 %v1674
        %v1746 = vunpack.c.l.b16 %v1675
        %v1747 = vunpack.c.l.b16 %v1676
        %v1748 = vunpack.c.l.b16 %v1677
        %v1749 = vunpack.c.l.b16 %v1678
        %v1750 = vunpack.c.l.b16 %v1679
        %v1751 = vpack.c.b16 %v1720, %v1719
        %v1752 = vpack.c.b16 %v1722, %v1721
        %v1753 = vpack.c.b16 %v1724, %v1723
        %v1754 = vpack.c.b16 %v1726, %v1725
        %v1755 = vpack.c.b16 %v1728, %v1727
        %v1756 = vpack.c.b16 %v1730, %v1729
        %v1757 = vpack.c.b16 %v1732, %v1731
        %v1758 = vpack.c.b16 %v1734, %v1733
        %v1759 = vpack.c.b16 %v1736, %v1735
        %v1760 = vpack.c.b16 %v1738, %v1737
        %v1761 = vpack.c.b16 %v1740, %v1739
        %v1762 = vpack.c.b16 %v1742, %v1741
        %v1763 = vpack.c.b16 %v1744, %v1743
        %v1764 = vpack.c.b16 %v1746, %v1745
        %v1765 = vpack.c.b16 %v1748, %v1747
        %v1766 = vpack.c.b16 %v1750, %v1749
        %1783 = vmatprep.subr.bf16.mxu0 0
        %1784 = vmatpush1.bf16.msra.mxu0 %v1751
        %1785 = vmatprep.subr.bf16.mxu0 0
        %1786 = vmatpush1.bf16.msra.mxu0 %v1752
        %1787 = vmatprep.subr.bf16.mxu0 0
        %1788 = vmatpush1.bf16.msra.mxu0 %v1753
        %1789 = vmatprep.subr.bf16.mxu0 0
        %1790 = vmatpush1.bf16.msra.mxu0 %v1754
        %1791 = vmatprep.subr.bf16.mxu0 0
        %1792 = vmatpush1.bf16.msra.mxu0 %v1755
        %1793 = vmatprep.subr.bf16.mxu0 0
        %1794 = vmatpush1.bf16.msra.mxu0 %v1756
        %1795 = vmatprep.subr.bf16.mxu0 0
        %1796 = vmatpush1.bf16.msra.mxu0 %v1757
        %1797 = vmatprep.subr.bf16.mxu0 0
        %1798 = vmatpush1.bf16.msra.mxu0 %v1758
        %1799 = vmatprep.subr.bf16.mxu0 0
        %1800 = vmatpush1.bf16.msra.mxu0 %v1759
        %1801 = vmatprep.subr.bf16.mxu0 0
        %1802 = vmatpush1.bf16.msra.mxu0 %v1760
        %1803 = vmatprep.subr.bf16.mxu0 0
        %1804 = vmatpush1.bf16.msra.mxu0 %v1761
        %1805 = vmatprep.subr.bf16.mxu0 0
        %1806 = vmatpush1.bf16.msra.mxu0 %v1762
        %1807 = vmatprep.subr.bf16.mxu0 0
        %1808 = vmatpush1.bf16.msra.mxu0 %v1763
        %1809 = vmatprep.subr.bf16.mxu0 0
        %1810 = vmatpush1.bf16.msra.mxu0 %v1764
        %1811 = vmatprep.subr.bf16.mxu0 0
        %1812 = vmatpush1.bf16.msra.mxu0 %v1765
        %1813 = vmatprep.subr.bf16.mxu0 0
        %1814 = vmatpush1.bf16.msra.mxu0 %v1766
        %1815 = vmatprep.mubr.bf16.mxu0 %v1647
        %1816 = vmatmul.mubr.bf16.gmra.mrb[0].mxu0 %v1646
        %v1817 = vpop.f32.mrb[0].mxu0
        %v1818 = vadd.f32 %v1685, %v1817
        %v1819 = vpop.f32.mrb[0].mxu0
        %v1820 = vpop.f32.mrb[0].mxu0
        %v1821 = vadd.f32 %v1685, %v1820
        %v1822 = vpop.f32.mrb[0].mxu0
        %1823 = vdwg.mxu0
        %v1824 = vadd.f32 %v1473, %v1818
        %v1825 = vadd.f32 %v1474, %v1821
        %1826 = vst.msk [vmem:[%s406] sm:$0xff] %vm415, %v1824
        %1827 = vst.msk [vmem:[%s406 + $0x8] sm:$0xff] %vm415, %v1825
        %s1828 = sand.u32 %s291, 1
        %s1829 = scalar_lea.sflag [#allocation3], %s1828
        %s1830 = sand.u32 %s291, 1
        %s1831 = smul.addr %s1830, 16
        %s1832 = scalar_lea.vmem [#allocation2], %s1831
        // Predicated region
        $region69: #{block_forward.1} parent=67 // pred_check
          %p1833 = pneg %p301
        $region70: #{block_forward.1} parent=67 // pred_check_branch
          %1835 = sbr.rel (%p1833) target = $region72
        $region71: #{block_forward.1} parent=67 // pred_region
          %s1837 = ssub.s32 256, 256
          %1838 = vsyncadd %s1829, %s1837
          %s1839 = smul.addr %s26, 2
          %s1840 = smul.addr %s1839, 128
          %s1841 = scalar_lea.hbm %s12, %s1840
          %s1842 = sshll.u32 %s1832, 4
          %s1843 = int_to_ptr.vmem [resolvable:$true] %s1842
          %1848 = dma.vmem_to_hbm [thread:$0]  %s1843, 256, %s1841, %s1829, 128, 128, 8
        $region72: #{block_forward.1} parent=67 // pred_fallthru
          _
      $region68: #{block_forward.1} parent=5 // pred_fallthru
        _
      %p1849 = scmp.le.s32.totalorder 2, %s21
      // Predicated region
      $region73: #{block_forward.1} parent=5 // pred_check
        %p1850 = pneg %p1849
      $region74: #{block_forward.1} parent=5 // pred_check_branch
        %1852 = sbr.rel (%p1850) target = $region76
      $region75: #{block_forward.1} parent=5 // pred_region
        %s1853 = ssub.s32 %s21, 2
        // Predicated region
        $region77: #{block_forward.1} parent=75 // pred_check
          %p1854 = pneg %p307
        $region78: #{block_forward.1} parent=75 // pred_check_branch
          %1856 = sbr.rel (%p1854) target = $region80
        $region79: #{block_forward.1} parent=75 // pred_region
          %s1857 = sand.u32 %s292, 1
          %s1858 = scalar_lea.sflag [#allocation3], %s1857
          %s1859 = sand.u32 %s292, 1
          %s1860 = smul.addr %s1859, 16
          %s1861 = scalar_lea.vmem [#allocation2], %s1860
          %1862 = dma.done %s1858, 256
        $region80: #{block_forward.1} parent=75 // pred_fallthru
          _
      $region76: #{block_forward.1} parent=5 // pred_fallthru
        _
    $region6: #{block_forward.1} parent=1 // loop_footer
      %s25 = sadd.s32 1, %s21
    $region7: #{block_forward.1} parent=1 // loop_footer_branch
      %20 = sbr.rel target = $region3
    $region8: #{block_forward.1} parent=1 // loop_exit
      _
    %1863 = vsyncpa [#allocation3], 1
    %s1864 = scalar_lea.sflag [#allocation3], 1
    %1865 = vsyncpa %s1864, 1

</llo_original>
